<compile_context>
chip_gen: v7x
topology: tpu7x:2x2x1
jax: 0.10.0
libtpu: 0.0.40
codegen_flags: <defaults>
</compile_context>

<pallas_src>
import functools

import jax
import jax.numpy as jnp
from jax import lax
from jax.experimental import pallas as pl
from jax.experimental.pallas import tpu as pltpu


_SUB = 8                                 # sublane granularity
_TARGET_TILE_PX = 64 * 1024              # ~64K px / grid tile (~256 KiB per f32 plane)
_INVALID_COORD = -30000.0                # pre-scaled sentinel; tanh(2*sqrt(d2)) == 1.0
                                         # exactly, same as the reference's 1e6 coord.

_NCH = 5                                 # r, g, b, pos, neg
_GRAM_PAIRS = tuple((i, j) for i in range(_NCH) for j in range(i, _NCH))
_NSTATS = _NCH + len(_GRAM_PAIRS)        # 5 channel sums + 15 Gram entries = 20


def _coord_planes(clicks, row_base, rs, W, num_points, inv_r):
    """DistMaps pos/neg features for `rs` rows starting at global row `row_base`.

    d2 = (rn^2 + cn^2) + min_p (a_p*rn + b_p*cn + k_p), a/b/k precomputed per click
    (invalid clicks carry a huge k so they never win the min and saturate tanh to 1).
    """
    if not clicks:                       # num_points == 0: reference saturates to 1
        ones = jnp.ones((rs, W), jnp.float32)
        return ones, ones

    rbase = row_base.astype(jnp.float32) * inv_r
    ri = lax.broadcasted_iota(jnp.int32, (rs, W), 0).astype(jnp.float32)
    ci = lax.broadcasted_iota(jnp.int32, (rs, W), 1).astype(jnp.float32)
    rn = ri * inv_r + rbase              # scaled row coordinate
    cn = ci * inv_r                      # scaled col coordinate
    base = rn * rn + cn * cn

    m_pos = None
    m_neg = None
    for p, (ap, bp, kp) in enumerate(clicks):
        lin = ap * rn + kp
        lin = lin + bp * cn
        if p < num_points:               # first P slots = positive clicks
            m_pos = lin if m_pos is None else jnp.minimum(m_pos, lin)
        else:                            # last P slots = negative clicks
            m_neg = lin if m_neg is None else jnp.minimum(m_neg, lin)

    # clamp: the expanded form can round slightly negative at the click pixel
    d_pos = jnp.maximum(base + m_pos, 0.0)
    d_neg = jnp.maximum(base + m_neg, 0.0)
    pos = jnp.tanh(2.0 * jnp.sqrt(d_pos))
    neg = jnp.tanh(2.0 * jnp.sqrt(d_neg))
    return pos, neg


def _stats_kernel(a_ref, b_ref, k_ref, img_ref, coord_ref, stat_ref, *,
                  tile_h, sub_h, W, H, n_clicks, num_points, inv_r, needs_mask):
    """Pass 1: DistMaps planes (written to HBM for reuse) + input-channel statistics.

    stat_ref is a per-batch accumulator (batch axis "parallel" -> megacore-safe on
    v7x); the spatial-tile axis is "arbitrary" and revisits the same block.
    """
    bidx = pl.program_id(0)
    t = pl.program_id(1)

    @pl.when(t == 0)
    def _init():
        stat_ref[...] = jnp.zeros_like(stat_ref)

    # hoist per-click scalars out of the chunk loop (scalar-unit SMEM reads)
    clicks = [(a_ref[bidx, p], b_ref[bidx, p], k_ref[bidx, p])
              for p in range(n_clicks)]

    for r0 in range(0, tile_h, sub_h):                    # static row chunking
        rs = min(sub_h, tile_h - r0)                      # always a multiple of 8
        row_base = t * tile_h + r0

        pos, neg = _coord_planes(clicks, row_base, rs, W, num_points, inv_r)
        coord_ref[0, r0:r0 + rs, :] = pos
        coord_ref[1, r0:r0 + rs, :] = neg

        chans = [img_ref[0, r0:r0 + rs, :],
                 img_ref[1, r0:r0 + rs, :],
                 img_ref[2, r0:r0 + rs, :],
                 pos, neg]
        if needs_mask:                                    # only when last tile is partial
            rowi = lax.broadcasted_iota(jnp.int32, (rs, W), 0) + row_base
            valid = rowi < H
            chans = [jnp.where(valid, c, 0.0) for c in chans]

        groups = rs // _SUB

        def _acc(s, x):
            # accumulate (8, W) vreg partials — pure VPU adds, no cross-lane reduces
            part = x if groups == 1 else jnp.sum(x.reshape(groups, _SUB, W), axis=0)
            stat_ref[s] = stat_ref[s] + part

        for i in range(_NCH):
            _acc(i, chans[i])
        for idx, (i, j) in enumerate(_GRAM_PAIRS):
            _acc(_NCH + idx, chans[i] * chans[j])


def _apply_kernel(w1s_ref, off_ref, w2_ref, b2_ref, img_ref, coord_ref, out_ref, *,
                  tile_h, sub_h, W, hidden_ch):
    """Pass 2: conv1(scale-folded) -> BN offset -> ReLU -> conv2, streamed per chunk."""
    # hoist all scalar weights out of the chunk loops
    w1s = [[w1s_ref[o, i] for i in range(_NCH)] for o in range(hidden_ch)]
    off = [off_ref[o] for o in range(hidden_ch)]
    w2 = [[w2_ref[c, o] for o in range(hidden_ch)] for c in range(3)]
    b2 = [b2_ref[c] for c in range(3)]

    for r0 in range(0, tile_h, sub_h):
        rs = min(sub_h, tile_h - r0)
        chans = [img_ref[0, r0:r0 + rs, :],
                 img_ref[1, r0:r0 + rs, :],
                 img_ref[2, r0:r0 + rs, :],
                 coord_ref[0, r0:r0 + rs, :],
                 coord_ref[1, r0:r0 + rs, :]]
        acc = [None, None, None]
        for o in range(hidden_ch):                        # hidden planes never all live
            h = w1s[o][0] * chans[0]
            for i in range(1, _NCH):
                h = h + w1s[o][i] * chans[i]
            a = jnp.maximum(h + off[o], 0.0)              # folded BN + ReLU
            for c in range(3):
                term = w2[c][o] * a
                acc[c] = term if acc[c] is None else acc[c] + term
        for c in range(3):
            out_ref[c, r0:r0 + rs, :] = acc[c] + b2[c]


def ifss_rgb_conv_forward(image, points, params, norm_radius=260.0, eps=1e-5):
    """image: (B, 3, H, W) NCHW; points: (B, 2*num_points, 3) = (row, col, idx).

    Returns the rgb_conv output (B, 3, H, W), i.e. the tensor `x` that iFSSModel
    feeds into support_forward.
    """
    B, C, H, W = image.shape
    assert C == 3
    num_points = points.shape[1] // 2
    n_clicks = 2 * num_points
    inv_r = 1.0 / float(norm_radius)

    imgf = image.astype(jnp.float32)

    # ---- spatial tiling on the native layout: rows in multiples of 8, full W lanes
    tile_h_cap = max(_SUB, (_TARGET_TILE_PX // W) // _SUB * _SUB)
    tile_h = min(-(-H // _SUB) * _SUB, tile_h_cap)
    n_tiles = -(-H // tile_h)
    needs_mask = (n_tiles * tile_h != H)
    sub1 = min(tile_h, 32)        # stats pass: amortize the 20-plane accumulator RMW
    sub2 = min(tile_h, 16)        # apply pass: keep chans + 3 accumulators in vregs

    # ---- per-click scalars (host): a = -2*y/r, b = -2*x/r, k = (y^2+x^2)/r^2
    if n_clicks > 0:
        ys = points[:, :, 0].astype(jnp.float32)
        xs = points[:, :, 1].astype(jnp.float32)
        valid = jnp.maximum(ys, xs) >= 0.0
        yn = jnp.where(valid, ys * inv_r, jnp.float32(_INVALID_COORD))
        xn = jnp.where(valid, xs * inv_r, jnp.float32(_INVALID_COORD))
        a_coef = -2.0 * yn
        b_coef = -2.0 * xn
        k_coef = yn * yn + xn * xn
    else:
        a_coef = b_coef = k_coef = jnp.zeros((B, 1), jnp.float32)

    # conv1 bias (params["b1"]) cancels inside BatchNorm and is not used.
    w1 = params["w1"].astype(jnp.float32)        # (8, 5)
    gamma = params["gamma"].astype(jnp.float32)  # (8,)
    beta = params["beta"].astype(jnp.float32)    # (8,)
    w2 = params["w2"].astype(jnp.float32)        # (3, 8)
    b2 = params["b2"].astype(jnp.float32)        # (3,)
    hidden_ch = w1.shape[0]

    grid = (B, n_tiles)
    smem = pl.BlockSpec(memory_space=pltpu.MemorySpace.SMEM)
    img_spec = pl.BlockSpec((None, 3, tile_h, W), lambda b, t: (b, 0, t, 0))
    coord_spec = pl.BlockSpec((None, 2, tile_h, W), lambda b, t: (b, 0, t, 0))
    stat_spec = pl.BlockSpec((None, _NSTATS, _SUB, W), lambda b, t: (b, 0, 0, 0))

    # ---- pass 1: coord features (side output) + channel sums / Gram matrix
    stats_fn = functools.partial(
        _stats_kernel, tile_h=tile_h, sub_h=sub1, W=W, H=H, n_clicks=n_clicks,
        num_points=num_points, inv_r=inv_r, needs_mask=needs_mask)
    coord_feat, stats = pl.pallas_call(
        stats_fn,
        grid=grid,
        out_shape=(jax.ShapeDtypeStruct((B, 2, H, W), jnp.float32),
                   jax.ShapeDtypeStruct((B, _NSTATS, _SUB, W), jnp.float32)),
        in_specs=[smem, smem, smem, img_spec],
        out_specs=(coord_spec, stat_spec),
        compiler_params=pltpu.CompilerParams(
            dimension_semantics=("parallel", "arbitrary")),
    )(a_coef, b_coef, k_coef, imgf)

    # ---- host fold: BatchNorm2d training stats (biased variance) via the Gram matrix
    n = jnp.float32(B * H * W)
    tot = jnp.sum(stats, axis=(0, 2, 3))             # (20,)
    s = tot[:_NCH]
    gvals = tot[_NCH:]
    iu = jnp.array([i for i, _ in _GRAM_PAIRS], jnp.int32)
    ju = jnp.array([j for _, j in _GRAM_PAIRS], jnp.int32)
    Gu = jnp.zeros((_NCH, _NCH), jnp.float32).at[iu, ju].set(gvals)
    G = Gu + Gu.T - jnp.diag(jnp.diag(Gu))
    mean_c = s / n
    cov = G / n - jnp.outer(mean_c, mean_c)
    mean_h = w1 @ mean_c                              # (8,)  (b1 cancels)
    var_h = jnp.maximum(jnp.einsum('oi,ij,oj->o', w1, cov, w1), 0.0)
    scale = gamma * lax.rsqrt(var_h + jnp.float32(eps))
    offset = beta - mean_h * scale
    w1s = w1 * scale[:, None]                         # BN scale folded into conv1

    # ---- pass 2: apply (independent tiles -> both axes "parallel" for megacore)
    apply_fn = functools.partial(_apply_kernel, tile_h=tile_h, sub_h=sub2, W=W,
                                 hidden_ch=hidden_ch)
    out = pl.pallas_call(
        apply_fn,
        grid=grid,
        out_shape=jax.ShapeDtypeStruct((B, 3, H, W), jnp.float32),
        in_specs=[smem, smem, smem, smem, img_spec, coord_spec],
        out_specs=pl.BlockSpec((None, 3, tile_h, W), lambda b, t: (b, 0, t, 0)),
        compiler_params=pltpu.CompilerParams(
            dimension_semantics=("parallel", "parallel")),
    )(w1s, offset, w2, b2, imgf, coord_feat)

    # TODO(synk): support_forward / query_forward / backbone_forward are abstract
    # (NotImplementedError) in iFSSModel, so the per-branch heads and the bilinear
    # upsampling of their outputs are not implemented here.
    return out


def _reference(image, points, params, norm_radius=260.0, eps=1e-5):
    """Pure-JAX reference of the same rgb_conv forward (for a sanity check)."""
    B, _, H, W = image.shape
    P = points.shape[1] // 2
    rows = jnp.arange(H, dtype=jnp.float32)[:, None]
    cols = jnp.arange(W, dtype=jnp.float32)[None, :]
    feats = []
    for b in range(B):
        for lo, hi in ((0, P), (P, 2 * P)):
            dmin = jnp.full((H, W), 1e12, jnp.float32)
            for p in range(lo, hi):
                y = points[b, p, 0]
                x = points[b, p, 1]
                ok = jnp.maximum(y, x) >= 0
                d2 = ((rows - y) / norm_radius) ** 2 + ((cols - x) / norm_radius) ** 2
                dmin = jnp.minimum(dmin, jnp.where(ok, d2, 1e12))
            feats.append(jnp.tanh(2.0 * jnp.sqrt(dmin)))
    coord = jnp.stack(feats).reshape(B, 2, H, W)
    x = jnp.concatenate([image, coord], axis=1)                          # (B,5,H,W)
    h = jnp.einsum('oc,bchw->bohw', params["w1"], x) + params["b1"][None, :, None, None]
    mean = h.mean(axis=(0, 2, 3))
    var = h.var(axis=(0, 2, 3))
    hn = (h - mean[None, :, None, None]) * lax.rsqrt(var[None, :, None, None] + eps)
    hn = hn * params["gamma"][None, :, None, None] + params["beta"][None, :, None, None]
    a = jnp.maximum(hn, 0.0)
    return jnp.einsum('oc,bchw->bohw', params["w2"], a) + params["b2"][None, :, None, None]


if __name__ == "__main__":
    key = jax.random.PRNGKey(0)
    k_img, k_py, k_px, k_valid, k_w1, k_w2 = jax.random.split(key, 6)

    B, H, W = 2, 16, 16
    num_points = 4                      # points tensor: (B, 2*num_points, 3)

    image = jax.random.normal(k_img, (B, 3, H, W), jnp.float32)

    # deterministic synthetic clicks: (row, col, click_index), -1 marks invalid
    pys = jax.random.randint(k_py, (B, 2 * num_points), 0, H).astype(jnp.float32)
    pxs = jax.random.randint(k_px, (B, 2 * num_points), 0, W).astype(jnp.float32)
    pidx = jnp.tile(jnp.arange(2 * num_points, dtype=jnp.float32)[None, :], (B, 1))
    valid = jax.random.bernoulli(k_valid, 0.7, (B, 2 * num_points))
    pys = jnp.where(valid, pys, -1.0)
    pxs = jnp.where(valid, pxs, -1.0)
    pidx = jnp.where(valid, pidx, -1.0)
    points = jnp.stack([pys, pxs, pidx], axis=-1)          # (B, 8, 3)

    # rgb_conv parameters (coord_feature_ch = 2  ->  in 5, hidden 8, out 3)
    cin1, cout1 = 5, 8
    params = {
        "w1": 0.2 * jax.random.normal(k_w1, (cout1, cin1), jnp.float32),
        "b1": jnp.linspace(-0.1, 0.1, cout1, dtype=jnp.float32),  # cancelled by BN
        "gamma": jnp.ones((cout1,), jnp.float32),                 # BatchNorm2d defaults
        "beta": jnp.zeros((cout1,), jnp.float32),
        "w2": 0.2 * jax.random.normal(k_w2, (3, cout1), jnp.float32),
        "b2": jnp.linspace(-0.05, 0.05, 3, dtype=jnp.float32),
    }

    out = ifss_rgb_conv_forward(image, points, params, norm_radius=260.0)
    jax.block_until_ready(out)
    assert out.shape == (B, 3, H, W) and out.dtype == jnp.float32

    ref = _reference(image, points, params, norm_radius=260.0)
    max_err = float(jnp.max(jnp.abs(out - ref)))
    assert max_err < 1e-3, f"max abs err {max_err}"
    print("KERNEL_OK")
</pallas_src>

<mosaic_0001>
module attributes {stable_mosaic.version = 11 : i64} {
  func.func @_stats_kernel(%arg0: i32, %arg1: i32, %arg2: memref<2x8xf32, #tpu.memory_space<smem>>, %arg3: memref<2x8xf32, #tpu.memory_space<smem>>, %arg4: memref<2x8xf32, #tpu.memory_space<smem>>, %arg5: memref<1x3x16x16xf32, #tpu.memory_space<vmem>>, %arg6: memref<1x2x16x16xf32, #tpu.memory_space<vmem>>, %arg7: memref<1x20x8x16xf32, #tpu.memory_space<vmem>>) attributes {dimension_semantics = [#tpu.dimension_semantics<parallel>, #tpu.dimension_semantics<arbitrary>], iteration_bounds = array<i64: 2, 1>, scalar_prefetch = 0 : i64, scratch_operands = 0 : i64, tpu.core_type = #tpu.core_type<tc>, window_params = [{transform_indices = @transform_0, window_bounds = array<i64: 2, 8>}, {transform_indices = @transform_1, window_bounds = array<i64: 2, 8>}, {transform_indices = @transform_2, window_bounds = array<i64: 2, 8>}, {transform_indices = @transform_3, window_bounds = array<i64: 1, 3, 16, 16>}, {transform_indices = @transform_4, window_bounds = array<i64: 1, 2, 16, 16>}, {transform_indices = @transform_5, window_bounds = array<i64: 1, 20, 8, 16>}]} {
    %c0_i32 = arith.constant 0 : i32
    %0 = arith.cmpi eq, %arg1, %c0_i32 : i32
    %1 = arith.extui %0 : i1 to i32
    %c0_i32_0 = arith.constant 0 : i32
    %2 = arith.cmpi ne, %1, %c0_i32_0 : i32
    scf.if %2 {
      %cst_212 = arith.constant 0.000000e+00 : f32
      %331 = vector.broadcast %cst_212 : f32 to vector<20x8x16xf32>
      %c0_213 = arith.constant 0 : index
      %c0_214 = arith.constant 0 : index
      %c0_215 = arith.constant 0 : index
      %c0_216 = arith.constant 0 : index
      %332 = vector.load %arg7[%c0_213, %c0_214, %c0_215, %c0_216] : memref<1x20x8x16xf32, #tpu.memory_space<vmem>>, vector<1x20x8x16xf32>
      %333 = vector.shape_cast %332 : vector<1x20x8x16xf32> to vector<20x8x16xf32>
      %334 = vector.shape_cast %331 : vector<20x8x16xf32> to vector<1x20x8x16xf32>
      tpu.vector_store %arg7[%c0_213, %c0_214, %c0_215, %c0_216], %334 {strides = array<i32>} : memref<1x20x8x16xf32, #tpu.memory_space<vmem>>, vector<1x20x8x16xf32>,
    } else {
    }
    %3 = arith.index_cast %arg0 : i32 to index
    %c0 = arith.constant 0 : index
    %4 = memref.load %arg2[%3, %c0] : memref<2x8xf32, #tpu.memory_space<smem>>
    %5 = arith.index_cast %arg0 : i32 to index
    %c0_1 = arith.constant 0 : index
    %6 = memref.load %arg3[%5, %c0_1] : memref<2x8xf32, #tpu.memory_space<smem>>
    %7 = arith.index_cast %arg0 : i32 to index
    %c0_2 = arith.constant 0 : index
    %8 = memref.load %arg4[%7, %c0_2] : memref<2x8xf32, #tpu.memory_space<smem>>
    %9 = arith.index_cast %arg0 : i32 to index
    %c1 = arith.constant 1 : index
    %10 = memref.load %arg2[%9, %c1] : memref<2x8xf32, #tpu.memory_space<smem>>
    %11 = arith.index_cast %arg0 : i32 to index
    %c1_3 = arith.constant 1 : index
    %12 = memref.load %arg3[%11, %c1_3] : memref<2x8xf32, #tpu.memory_space<smem>>
    %13 = arith.index_cast %arg0 : i32 to index
    %c1_4 = arith.constant 1 : index
    %14 = memref.load %arg4[%13, %c1_4] : memref<2x8xf32, #tpu.memory_space<smem>>
    %15 = arith.index_cast %arg0 : i32 to index
    %c2 = arith.constant 2 : index
    %16 = memref.load %arg2[%15, %c2] : memref<2x8xf32, #tpu.memory_space<smem>>
    %17 = arith.index_cast %arg0 : i32 to index
    %c2_5 = arith.constant 2 : index
    %18 = memref.load %arg3[%17, %c2_5] : memref<2x8xf32, #tpu.memory_space<smem>>
    %19 = arith.index_cast %arg0 : i32 to index
    %c2_6 = arith.constant 2 : index
    %20 = memref.load %arg4[%19, %c2_6] : memref<2x8xf32, #tpu.memory_space<smem>>
    %21 = arith.index_cast %arg0 : i32 to index
    %c3 = arith.constant 3 : index
    %22 = memref.load %arg2[%21, %c3] : memref<2x8xf32, #tpu.memory_space<smem>>
    %23 = arith.index_cast %arg0 : i32 to index
    %c3_7 = arith.constant 3 : index
    %24 = memref.load %arg3[%23, %c3_7] : memref<2x8xf32, #tpu.memory_space<smem>>
    %25 = arith.index_cast %arg0 : i32 to index
    %c3_8 = arith.constant 3 : index
    %26 = memref.load %arg4[%25, %c3_8] : memref<2x8xf32, #tpu.memory_space<smem>>
    %27 = arith.index_cast %arg0 : i32 to index
    %c4 = arith.constant 4 : index
    %28 = memref.load %arg2[%27, %c4] : memref<2x8xf32, #tpu.memory_space<smem>>
    %29 = arith.index_cast %arg0 : i32 to index
    %c4_9 = arith.constant 4 : index
    %30 = memref.load %arg3[%29, %c4_9] : memref<2x8xf32, #tpu.memory_space<smem>>
    %31 = arith.index_cast %arg0 : i32 to index
    %c4_10 = arith.constant 4 : index
    %32 = memref.load %arg4[%31, %c4_10] : memref<2x8xf32, #tpu.memory_space<smem>>
    %33 = arith.index_cast %arg0 : i32 to index
    %c5 = arith.constant 5 : index
    %34 = memref.load %arg2[%33, %c5] : memref<2x8xf32, #tpu.memory_space<smem>>
    %35 = arith.index_cast %arg0 : i32 to index
    %c5_11 = arith.constant 5 : index
    %36 = memref.load %arg3[%35, %c5_11] : memref<2x8xf32, #tpu.memory_space<smem>>
    %37 = arith.index_cast %arg0 : i32 to index
    %c5_12 = arith.constant 5 : index
    %38 = memref.load %arg4[%37, %c5_12] : memref<2x8xf32, #tpu.memory_space<smem>>
    %39 = arith.index_cast %arg0 : i32 to index
    %c6 = arith.constant 6 : index
    %40 = memref.load %arg2[%39, %c6] : memref<2x8xf32, #tpu.memory_space<smem>>
    %41 = arith.index_cast %arg0 : i32 to index
    %c6_13 = arith.constant 6 : index
    %42 = memref.load %arg3[%41, %c6_13] : memref<2x8xf32, #tpu.memory_space<smem>>
    %43 = arith.index_cast %arg0 : i32 to index
    %c6_14 = arith.constant 6 : index
    %44 = memref.load %arg4[%43, %c6_14] : memref<2x8xf32, #tpu.memory_space<smem>>
    %45 = arith.index_cast %arg0 : i32 to index
    %c7 = arith.constant 7 : index
    %46 = memref.load %arg2[%45, %c7] : memref<2x8xf32, #tpu.memory_space<smem>>
    %47 = arith.index_cast %arg0 : i32 to index
    %c7_15 = arith.constant 7 : index
    %48 = memref.load %arg3[%47, %c7_15] : memref<2x8xf32, #tpu.memory_space<smem>>
    %49 = arith.index_cast %arg0 : i32 to index
    %c7_16 = arith.constant 7 : index
    %50 = memref.load %arg4[%49, %c7_16] : memref<2x8xf32, #tpu.memory_space<smem>>
    %c16_i32 = arith.constant 16 : i32
    %51 = arith.muli %arg1, %c16_i32 : i32
    %c0_i32_17 = arith.constant 0 : i32
    %52 = arith.addi %51, %c0_i32_17 : i32
    %53 = arith.sitofp %52 : i32 to f32
    %cst = arith.constant 0.00384615385 : f32
    %54 = arith.mulf %53, %cst : f32
    %55 = tpu.iota {dimensions = array<i32: 0>} : vector<16x16xi32>
    %56 = arith.sitofp %55 : vector<16x16xi32> to vector<16x16xf32>
    %57 = tpu.iota {dimensions = array<i32: 1>} : vector<16x16xi32>
    %58 = arith.sitofp %57 : vector<16x16xi32> to vector<16x16xf32>
    %cst_18 = arith.constant 0.00384615385 : f32
    %59 = vector.broadcast %cst_18 : f32 to vector<16x16xf32>
    %60 = arith.mulf %56, %59 : vector<16x16xf32>
    %61 = vector.broadcast %54 : f32 to vector<16x16xf32>
    %62 = arith.addf %60, %61 : vector<16x16xf32>
    %cst_19 = arith.constant 0.00384615385 : f32
    %63 = vector.broadcast %cst_19 : f32 to vector<16x16xf32>
    %64 = arith.mulf %58, %63 : vector<16x16xf32>
    %65 = arith.mulf %62, %62 : vector<16x16xf32>
    %66 = arith.mulf %64, %64 : vector<16x16xf32>
    %67 = arith.addf %65, %66 : vector<16x16xf32>
    %68 = vector.broadcast %4 : f32 to vector<16x16xf32>
    %69 = arith.mulf %68, %62 : vector<16x16xf32>
    %70 = vector.broadcast %8 : f32 to vector<16x16xf32>
    %71 = arith.addf %69, %70 : vector<16x16xf32>
    %72 = vector.broadcast %6 : f32 to vector<16x16xf32>
    %73 = arith.mulf %72, %64 : vector<16x16xf32>
    %74 = arith.addf %71, %73 : vector<16x16xf32>
    %75 = vector.broadcast %10 : f32 to vector<16x16xf32>
    %76 = arith.mulf %75, %62 : vector<16x16xf32>
    %77 = vector.broadcast %14 : f32 to vector<16x16xf32>
    %78 = arith.addf %76, %77 : vector<16x16xf32>
    %79 = vector.broadcast %12 : f32 to vector<16x16xf32>
    %80 = arith.mulf %79, %64 : vector<16x16xf32>
    %81 = arith.addf %78, %80 : vector<16x16xf32>
    %82 = arith.minimumf %74, %81 : vector<16x16xf32>
    %83 = vector.broadcast %16 : f32 to vector<16x16xf32>
    %84 = arith.mulf %83, %62 : vector<16x16xf32>
    %85 = vector.broadcast %20 : f32 to vector<16x16xf32>
    %86 = arith.addf %84, %85 : vector<16x16xf32>
    %87 = vector.broadcast %18 : f32 to vector<16x16xf32>
    %88 = arith.mulf %87, %64 : vector<16x16xf32>
    %89 = arith.addf %86, %88 : vector<16x16xf32>
    %90 = arith.minimumf %82, %89 : vector<16x16xf32>
    %91 = vector.broadcast %22 : f32 to vector<16x16xf32>
    %92 = arith.mulf %91, %62 : vector<16x16xf32>
    %93 = vector.broadcast %26 : f32 to vector<16x16xf32>
    %94 = arith.addf %92, %93 : vector<16x16xf32>
    %95 = vector.broadcast %24 : f32 to vector<16x16xf32>
    %96 = arith.mulf %95, %64 : vector<16x16xf32>
    %97 = arith.addf %94, %96 : vector<16x16xf32>
    %98 = arith.minimumf %90, %97 : vector<16x16xf32>
    %99 = vector.broadcast %28 : f32 to vector<16x16xf32>
    %100 = arith.mulf %99, %62 : vector<16x16xf32>
    %101 = vector.broadcast %32 : f32 to vector<16x16xf32>
    %102 = arith.addf %100, %101 : vector<16x16xf32>
    %103 = vector.broadcast %30 : f32 to vector<16x16xf32>
    %104 = arith.mulf %103, %64 : vector<16x16xf32>
    %105 = arith.addf %102, %104 : vector<16x16xf32>
    %106 = vector.broadcast %34 : f32 to vector<16x16xf32>
    %107 = arith.mulf %106, %62 : vector<16x16xf32>
    %108 = vector.broadcast %38 : f32 to vector<16x16xf32>
    %109 = arith.addf %107, %108 : vector<16x16xf32>
    %110 = vector.broadcast %36 : f32 to vector<16x16xf32>
    %111 = arith.mulf %110, %64 : vector<16x16xf32>
    %112 = arith.addf %109, %111 : vector<16x16xf32>
    %113 = arith.minimumf %105, %112 : vector<16x16xf32>
    %114 = vector.broadcast %40 : f32 to vector<16x16xf32>
    %115 = arith.mulf %114, %62 : vector<16x16xf32>
    %116 = vector.broadcast %44 : f32 to vector<16x16xf32>
    %117 = arith.addf %115, %116 : vector<16x16xf32>
    %118 = vector.broadcast %42 : f32 to vector<16x16xf32>
    %119 = arith.mulf %118, %64 : vector<16x16xf32>
    %120 = arith.addf %117, %119 : vector<16x16xf32>
    %121 = arith.minimumf %113, %120 : vector<16x16xf32>
    %122 = vector.broadcast %46 : f32 to vector<16x16xf32>
    %123 = arith.mulf %122, %62 : vector<16x16xf32>
    %124 = vector.broadcast %50 : f32 to vector<16x16xf32>
    %125 = arith.addf %123, %124 : vector<16x16xf32>
    %126 = vector.broadcast %48 : f32 to vector<16x16xf32>
    %127 = arith.mulf %126, %64 : vector<16x16xf32>
    %128 = arith.addf %125, %127 : vector<16x16xf32>
    %129 = arith.minimumf %121, %128 : vector<16x16xf32>
    %130 = arith.addf %67, %98 : vector<16x16xf32>
    %cst_20 = arith.constant 0.000000e+00 : f32
    %131 = vector.broadcast %cst_20 : f32 to vector<16x16xf32>
    %132 = arith.maximumf %130, %131 : vector<16x16xf32>
    %133 = arith.addf %67, %129 : vector<16x16xf32>
    %cst_21 = arith.constant 0.000000e+00 : f32
    %134 = vector.broadcast %cst_21 : f32 to vector<16x16xf32>
    %135 = arith.maximumf %133, %134 : vector<16x16xf32>
    %136 = math.sqrt %132 : vector<16x16xf32>
    %cst_22 = arith.constant 2.000000e+00 : f32
    %137 = vector.broadcast %cst_22 : f32 to vector<16x16xf32>
    %138 = arith.mulf %137, %136 : vector<16x16xf32>
    %139 = math.tanh %138 : vector<16x16xf32>
    %140 = math.sqrt %135 : vector<16x16xf32>
    %cst_23 = arith.constant 2.000000e+00 : f32
    %141 = vector.broadcast %cst_23 : f32 to vector<16x16xf32>
    %142 = arith.mulf %141, %140 : vector<16x16xf32>
    %143 = math.tanh %142 : vector<16x16xf32>
    %c0_24 = arith.constant 0 : index
    %c0_25 = arith.constant 0 : index
    %c0_26 = arith.constant 0 : index
    %c0_27 = arith.constant 0 : index
    %144 = vector.load %arg6[%c0_24, %c0_25, %c0_26, %c0_27] : memref<1x2x16x16xf32, #tpu.memory_space<vmem>>, vector<1x1x16x16xf32>
    %145 = vector.shape_cast %144 : vector<1x1x16x16xf32> to vector<16x16xf32>
    %146 = vector.shape_cast %139 : vector<16x16xf32> to vector<1x1x16x16xf32>
    tpu.vector_store %arg6[%c0_24, %c0_25, %c0_26, %c0_27], %146 {strides = array<i32>} : memref<1x2x16x16xf32, #tpu.memory_space<vmem>>, vector<1x1x16x16xf32>,
    %c0_28 = arith.constant 0 : index
    %c1_29 = arith.constant 1 : index
    %c0_30 = arith.constant 0 : index
    %c0_31 = arith.constant 0 : index
    %147 = vector.load %arg6[%c0_28, %c1_29, %c0_30, %c0_31] : memref<1x2x16x16xf32, #tpu.memory_space<vmem>>, vector<1x1x16x16xf32>
    %148 = vector.shape_cast %147 : vector<1x1x16x16xf32> to vector<16x16xf32>
    %149 = vector.shape_cast %143 : vector<16x16xf32> to vector<1x1x16x16xf32>
    tpu.vector_store %arg6[%c0_28, %c1_29, %c0_30, %c0_31], %149 {strides = array<i32>} : memref<1x2x16x16xf32, #tpu.memory_space<vmem>>, vector<1x1x16x16xf32>,
    %c0_32 = arith.constant 0 : index
    %c0_33 = arith.constant 0 : index
    %c0_34 = arith.constant 0 : index
    %c0_35 = arith.constant 0 : index
    %150 = vector.load %arg5[%c0_32, %c0_33, %c0_34, %c0_35] : memref<1x3x16x16xf32, #tpu.memory_space<vmem>>, vector<1x1x16x16xf32>
    %151 = vector.shape_cast %150 : vector<1x1x16x16xf32> to vector<16x16xf32>
    %c0_36 = arith.constant 0 : index
    %c1_37 = arith.constant 1 : index
    %c0_38 = arith.constant 0 : index
    %c0_39 = arith.constant 0 : index
    %152 = vector.load %arg5[%c0_36, %c1_37, %c0_38, %c0_39] : memref<1x3x16x16xf32, #tpu.memory_space<vmem>>, vector<1x1x16x16xf32>
    %153 = vector.shape_cast %152 : vector<1x1x16x16xf32> to vector<16x16xf32>
    %c0_40 = arith.constant 0 : index
    %c2_41 = arith.constant 2 : index
    %c0_42 = arith.constant 0 : index
    %c0_43 = arith.constant 0 : index
    %154 = vector.load %arg5[%c0_40, %c2_41, %c0_42, %c0_43] : memref<1x3x16x16xf32, #tpu.memory_space<vmem>>, vector<1x1x16x16xf32>
    %155 = vector.shape_cast %154 : vector<1x1x16x16xf32> to vector<16x16xf32>
    %156 = vector.shape_cast %151 : vector<16x16xf32> to vector<2x8x16xf32>
    %cst_44 = arith.constant dense<0.000000e+00> : vector<8x16xf32>
    %157 = vector.multi_reduction <add>, %156, %cst_44 [0] : vector<2x8x16xf32> to vector<8x16xf32>
    %c0_45 = arith.constant 0 : index
    %c0_46 = arith.constant 0 : index
    %c0_47 = arith.constant 0 : index
    %c0_48 = arith.constant 0 : index
    %158 = vector.load %arg7[%c0_45, %c0_46, %c0_47, %c0_48] : memref<1x20x8x16xf32, #tpu.memory_space<vmem>>, vector<1x1x8x16xf32>
    %159 = vector.shape_cast %158 : vector<1x1x8x16xf32> to vector<8x16xf32>
    %160 = arith.addf %159, %157 : vector<8x16xf32>
    %c0_49 = arith.constant 0 : index
    %c0_50 = arith.constant 0 : index
    %c0_51 = arith.constant 0 : index
    %c0_52 = arith.constant 0 : index
    %161 = vector.load %arg7[%c0_49, %c0_50, %c0_51, %c0_52] : memref<1x20x8x16xf32, #tpu.memory_space<vmem>>, vector<1x1x8x16xf32>
    %162 = vector.shape_cast %161 : vector<1x1x8x16xf32> to vector<8x16xf32>
    %163 = vector.shape_cast %160 : vector<8x16xf32> to vector<1x1x8x16xf32>
    tpu.vector_store %arg7[%c0_49, %c0_50, %c0_51, %c0_52], %163 {strides = array<i32>} : memref<1x20x8x16xf32, #tpu.memory_space<vmem>>, vector<1x1x8x16xf32>,
    %164 = vector.shape_cast %153 : vector<16x16xf32> to vector<2x8x16xf32>
    %cst_53 = arith.constant dense<0.000000e+00> : vector<8x16xf32>
    %165 = vector.multi_reduction <add>, %164, %cst_53 [0] : vector<2x8x16xf32> to vector<8x16xf32>
    %c0_54 = arith.constant 0 : index
    %c1_55 = arith.constant 1 : index
    %c0_56 = arith.constant 0 : index
    %c0_57 = arith.constant 0 : index
    %166 = vector.load %arg7[%c0_54, %c1_55, %c0_56, %c0_57] : memref<1x20x8x16xf32, #tpu.memory_space<vmem>>, vector<1x1x8x16xf32>
    %167 = vector.shape_cast %166 : vector<1x1x8x16xf32> to vector<8x16xf32>
    %168 = arith.addf %167, %165 : vector<8x16xf32>
    %c0_58 = arith.constant 0 : index
    %c1_59 = arith.constant 1 : index
    %c0_60 = arith.constant 0 : index
    %c0_61 = arith.constant 0 : index
    %169 = vector.load %arg7[%c0_58, %c1_59, %c0_60, %c0_61] : memref<1x20x8x16xf32, #tpu.memory_space<vmem>>, vector<1x1x8x16xf32>
    %170 = vector.shape_cast %169 : vector<1x1x8x16xf32> to vector<8x16xf32>
    %171 = vector.shape_cast %168 : vector<8x16xf32> to vector<1x1x8x16xf32>
    tpu.vector_store %arg7[%c0_58, %c1_59, %c0_60, %c0_61], %171 {strides = array<i32>} : memref<1x20x8x16xf32, #tpu.memory_space<vmem>>, vector<1x1x8x16xf32>,
    %172 = vector.shape_cast %155 : vector<16x16xf32> to vector<2x8x16xf32>
    %cst_62 = arith.constant dense<0.000000e+00> : vector<8x16xf32>
    %173 = vector.multi_reduction <add>, %172, %cst_62 [0] : vector<2x8x16xf32> to vector<8x16xf32>
    %c0_63 = arith.constant 0 : index
    %c2_64 = arith.constant 2 : index
    %c0_65 = arith.constant 0 : index
    %c0_66 = arith.constant 0 : index
    %174 = vector.load %arg7[%c0_63, %c2_64, %c0_65, %c0_66] : memref<1x20x8x16xf32, #tpu.memory_space<vmem>>, vector<1x1x8x16xf32>
    %175 = vector.shape_cast %174 : vector<1x1x8x16xf32> to vector<8x16xf32>
    %176 = arith.addf %175, %173 : vector<8x16xf32>
    %c0_67 = arith.constant 0 : index
    %c2_68 = arith.constant 2 : index
    %c0_69 = arith.constant 0 : index
    %c0_70 = arith.constant 0 : index
    %177 = vector.load %arg7[%c0_67, %c2_68, %c0_69, %c0_70] : memref<1x20x8x16xf32, #tpu.memory_space<vmem>>, vector<1x1x8x16xf32>
    %178 = vector.shape_cast %177 : vector<1x1x8x16xf32> to vector<8x16xf32>
    %179 = vector.shape_cast %176 : vector<8x16xf32> to vector<1x1x8x16xf32>
    tpu.vector_store %arg7[%c0_67, %c2_68, %c0_69, %c0_70], %179 {strides = array<i32>} : memref<1x20x8x16xf32, #tpu.memory_space<vmem>>, vector<1x1x8x16xf32>,
    %180 = vector.shape_cast %139 : vector<16x16xf32> to vector<2x8x16xf32>
    %cst_71 = arith.constant dense<0.000000e+00> : vector<8x16xf32>
    %181 = vector.multi_reduction <add>, %180, %cst_71 [0] : vector<2x8x16xf32> to vector<8x16xf32>
    %c0_72 = arith.constant 0 : index
    %c3_73 = arith.constant 3 : index
    %c0_74 = arith.constant 0 : index
    %c0_75 = arith.constant 0 : index
    %182 = vector.load %arg7[%c0_72, %c3_73, %c0_74, %c0_75] : memref<1x20x8x16xf32, #tpu.memory_space<vmem>>, vector<1x1x8x16xf32>
    %183 = vector.shape_cast %182 : vector<1x1x8x16xf32> to vector<8x16xf32>
    %184 = arith.addf %183, %181 : vector<8x16xf32>
    %c0_76 = arith.constant 0 : index
    %c3_77 = arith.constant 3 : index
    %c0_78 = arith.constant 0 : index
    %c0_79 = arith.constant 0 : index
    %185 = vector.load %arg7[%c0_76, %c3_77, %c0_78, %c0_79] : memref<1x20x8x16xf32, #tpu.memory_space<vmem>>, vector<1x1x8x16xf32>
    %186 = vector.shape_cast %185 : vector<1x1x8x16xf32> to vector<8x16xf32>
    %187 = vector.shape_cast %184 : vector<8x16xf32> to vector<1x1x8x16xf32>
    tpu.vector_store %arg7[%c0_76, %c3_77, %c0_78, %c0_79], %187 {strides = array<i32>} : memref<1x20x8x16xf32, #tpu.memory_space<vmem>>, vector<1x1x8x16xf32>,
    %188 = vector.shape_cast %143 : vector<16x16xf32> to vector<2x8x16xf32>
    %cst_80 = arith.constant dense<0.000000e+00> : vector<8x16xf32>
    %189 = vector.multi_reduction <add>, %188, %cst_80 [0] : vector<2x8x16xf32> to vector<8x16xf32>
    %c0_81 = arith.constant 0 : index
    %c4_82 = arith.constant 4 : index
    %c0_83 = arith.constant 0 : index
    %c0_84 = arith.constant 0 : index
    %190 = vector.load %arg7[%c0_81, %c4_82, %c0_83, %c0_84] : memref<1x20x8x16xf32, #tpu.memory_space<vmem>>, vector<1x1x8x16xf32>
    %191 = vector.shape_cast %190 : vector<1x1x8x16xf32> to vector<8x16xf32>
    %192 = arith.addf %191, %189 : vector<8x16xf32>
    %c0_85 = arith.constant 0 : index
    %c4_86 = arith.constant 4 : index
    %c0_87 = arith.constant 0 : index
    %c0_88 = arith.constant 0 : index
    %193 = vector.load %arg7[%c0_85, %c4_86, %c0_87, %c0_88] : memref<1x20x8x16xf32, #tpu.memory_space<vmem>>, vector<1x1x8x16xf32>
    %194 = vector.shape_cast %193 : vector<1x1x8x16xf32> to vector<8x16xf32>
    %195 = vector.shape_cast %192 : vector<8x16xf32> to vector<1x1x8x16xf32>
    tpu.vector_store %arg7[%c0_85, %c4_86, %c0_87, %c0_88], %195 {strides = array<i32>} : memref<1x20x8x16xf32, #tpu.memory_space<vmem>>, vector<1x1x8x16xf32>,
    %196 = arith.mulf %151, %151 : vector<16x16xf32>
    %197 = vector.shape_cast %196 : vector<16x16xf32> to vector<2x8x16xf32>
    %cst_89 = arith.constant dense<0.000000e+00> : vector<8x16xf32>
    %198 = vector.multi_reduction <add>, %197, %cst_89 [0] : vector<2x8x16xf32> to vector<8x16xf32>
    %c0_90 = arith.constant 0 : index
    %c5_91 = arith.constant 5 : index
    %c0_92 = arith.constant 0 : index
    %c0_93 = arith.constant 0 : index
    %199 = vector.load %arg7[%c0_90, %c5_91, %c0_92, %c0_93] : memref<1x20x8x16xf32, #tpu.memory_space<vmem>>, vector<1x1x8x16xf32>
    %200 = vector.shape_cast %199 : vector<1x1x8x16xf32> to vector<8x16xf32>
    %201 = arith.addf %200, %198 : vector<8x16xf32>
    %c0_94 = arith.constant 0 : index
    %c5_95 = arith.constant 5 : index
    %c0_96 = arith.constant 0 : index
    %c0_97 = arith.constant 0 : index
    %202 = vector.load %arg7[%c0_94, %c5_95, %c0_96, %c0_97] : memref<1x20x8x16xf32, #tpu.memory_space<vmem>>, vector<1x1x8x16xf32>
    %203 = vector.shape_cast %202 : vector<1x1x8x16xf32> to vector<8x16xf32>
    %204 = vector.shape_cast %201 : vector<8x16xf32> to vector<1x1x8x16xf32>
    tpu.vector_store %arg7[%c0_94, %c5_95, %c0_96, %c0_97], %204 {strides = array<i32>} : memref<1x20x8x16xf32, #tpu.memory_space<vmem>>, vector<1x1x8x16xf32>,
    %205 = arith.mulf %151, %153 : vector<16x16xf32>
    %206 = vector.shape_cast %205 : vector<16x16xf32> to vector<2x8x16xf32>
    %cst_98 = arith.constant dense<0.000000e+00> : vector<8x16xf32>
    %207 = vector.multi_reduction <add>, %206, %cst_98 [0] : vector<2x8x16xf32> to vector<8x16xf32>
    %c0_99 = arith.constant 0 : index
    %c6_100 = arith.constant 6 : index
    %c0_101 = arith.constant 0 : index
    %c0_102 = arith.constant 0 : index
    %208 = vector.load %arg7[%c0_99, %c6_100, %c0_101, %c0_102] : memref<1x20x8x16xf32, #tpu.memory_space<vmem>>, vector<1x1x8x16xf32>
    %209 = vector.shape_cast %208 : vector<1x1x8x16xf32> to vector<8x16xf32>
    %210 = arith.addf %209, %207 : vector<8x16xf32>
    %c0_103 = arith.constant 0 : index
    %c6_104 = arith.constant 6 : index
    %c0_105 = arith.constant 0 : index
    %c0_106 = arith.constant 0 : index
    %211 = vector.load %arg7[%c0_103, %c6_104, %c0_105, %c0_106] : memref<1x20x8x16xf32, #tpu.memory_space<vmem>>, vector<1x1x8x16xf32>
    %212 = vector.shape_cast %211 : vector<1x1x8x16xf32> to vector<8x16xf32>
    %213 = vector.shape_cast %210 : vector<8x16xf32> to vector<1x1x8x16xf32>
    tpu.vector_store %arg7[%c0_103, %c6_104, %c0_105, %c0_106], %213 {strides = array<i32>} : memref<1x20x8x16xf32, #tpu.memory_space<vmem>>, vector<1x1x8x16xf32>,
    %214 = arith.mulf %151, %155 : vector<16x16xf32>
    %215 = vector.shape_cast %214 : vector<16x16xf32> to vector<2x8x16xf32>
    %cst_107 = arith.constant dense<0.000000e+00> : vector<8x16xf32>
    %216 = vector.multi_reduction <add>, %215, %cst_107 [0] : vector<2x8x16xf32> to vector<8x16xf32>
    %c0_108 = arith.constant 0 : index
    %c7_109 = arith.constant 7 : index
    %c0_110 = arith.constant 0 : index
    %c0_111 = arith.constant 0 : index
    %217 = vector.load %arg7[%c0_108, %c7_109, %c0_110, %c0_111] : memref<1x20x8x16xf32, #tpu.memory_space<vmem>>, vector<1x1x8x16xf32>
    %218 = vector.shape_cast %217 : vector<1x1x8x16xf32> to vector<8x16xf32>
    %219 = arith.addf %218, %216 : vector<8x16xf32>
    %c0_112 = arith.constant 0 : index
    %c7_113 = arith.constant 7 : index
    %c0_114 = arith.constant 0 : index
    %c0_115 = arith.constant 0 : index
    %220 = vector.load %arg7[%c0_112, %c7_113, %c0_114, %c0_115] : memref<1x20x8x16xf32, #tpu.memory_space<vmem>>, vector<1x1x8x16xf32>
    %221 = vector.shape_cast %220 : vector<1x1x8x16xf32> to vector<8x16xf32>
    %222 = vector.shape_cast %219 : vector<8x16xf32> to vector<1x1x8x16xf32>
    tpu.vector_store %arg7[%c0_112, %c7_113, %c0_114, %c0_115], %222 {strides = array<i32>} : memref<1x20x8x16xf32, #tpu.memory_space<vmem>>, vector<1x1x8x16xf32>,
    %223 = arith.mulf %151, %139 : vector<16x16xf32>
    %224 = vector.shape_cast %223 : vector<16x16xf32> to vector<2x8x16xf32>
    %cst_116 = arith.constant dense<0.000000e+00> : vector<8x16xf32>
    %225 = vector.multi_reduction <add>, %224, %cst_116 [0] : vector<2x8x16xf32> to vector<8x16xf32>
    %c0_117 = arith.constant 0 : index
    %c8 = arith.constant 8 : index
    %c0_118 = arith.constant 0 : index
    %c0_119 = arith.constant 0 : index
    %226 = vector.load %arg7[%c0_117, %c8, %c0_118, %c0_119] : memref<1x20x8x16xf32, #tpu.memory_space<vmem>>, vector<1x1x8x16xf32>
    %227 = vector.shape_cast %226 : vector<1x1x8x16xf32> to vector<8x16xf32>
    %228 = arith.addf %227, %225 : vector<8x16xf32>
    %c0_120 = arith.constant 0 : index
    %c8_121 = arith.constant 8 : index
    %c0_122 = arith.constant 0 : index
    %c0_123 = arith.constant 0 : index
    %229 = vector.load %arg7[%c0_120, %c8_121, %c0_122, %c0_123] : memref<1x20x8x16xf32, #tpu.memory_space<vmem>>, vector<1x1x8x16xf32>
    %230 = vector.shape_cast %229 : vector<1x1x8x16xf32> to vector<8x16xf32>
    %231 = vector.shape_cast %228 : vector<8x16xf32> to vector<1x1x8x16xf32>
    tpu.vector_store %arg7[%c0_120, %c8_121, %c0_122, %c0_123], %231 {strides = array<i32>} : memref<1x20x8x16xf32, #tpu.memory_space<vmem>>, vector<1x1x8x16xf32>,
    %232 = arith.mulf %151, %143 : vector<16x16xf32>
    %233 = vector.shape_cast %232 : vector<16x16xf32> to vector<2x8x16xf32>
    %cst_124 = arith.constant dense<0.000000e+00> : vector<8x16xf32>
    %234 = vector.multi_reduction <add>, %233, %cst_124 [0] : vector<2x8x16xf32> to vector<8x16xf32>
    %c0_125 = arith.constant 0 : index
    %c9 = arith.constant 9 : index
    %c0_126 = arith.constant 0 : index
    %c0_127 = arith.constant 0 : index
    %235 = vector.load %arg7[%c0_125, %c9, %c0_126, %c0_127] : memref<1x20x8x16xf32, #tpu.memory_space<vmem>>, vector<1x1x8x16xf32>
    %236 = vector.shape_cast %235 : vector<1x1x8x16xf32> to vector<8x16xf32>
    %237 = arith.addf %236, %234 : vector<8x16xf32>
    %c0_128 = arith.constant 0 : index
    %c9_129 = arith.constant 9 : index
    %c0_130 = arith.constant 0 : index
    %c0_131 = arith.constant 0 : index
    %238 = vector.load %arg7[%c0_128, %c9_129, %c0_130, %c0_131] : memref<1x20x8x16xf32, #tpu.memory_space<vmem>>, vector<1x1x8x16xf32>
    %239 = vector.shape_cast %238 : vector<1x1x8x16xf32> to vector<8x16xf32>
    %240 = vector.shape_cast %237 : vector<8x16xf32> to vector<1x1x8x16xf32>
    tpu.vector_store %arg7[%c0_128, %c9_129, %c0_130, %c0_131], %240 {strides = array<i32>} : memref<1x20x8x16xf32, #tpu.memory_space<vmem>>, vector<1x1x8x16xf32>,
    %241 = arith.mulf %153, %153 : vector<16x16xf32>
    %242 = vector.shape_cast %241 : vector<16x16xf32> to vector<2x8x16xf32>
    %cst_132 = arith.constant dense<0.000000e+00> : vector<8x16xf32>
    %243 = vector.multi_reduction <add>, %242, %cst_132 [0] : vector<2x8x16xf32> to vector<8x16xf32>
    %c0_133 = arith.constant 0 : index
    %c10 = arith.constant 10 : index
    %c0_134 = arith.constant 0 : index
    %c0_135 = arith.constant 0 : index
    %244 = vector.load %arg7[%c0_133, %c10, %c0_134, %c0_135] : memref<1x20x8x16xf32, #tpu.memory_space<vmem>>, vector<1x1x8x16xf32>
    %245 = vector.shape_cast %244 : vector<1x1x8x16xf32> to vector<8x16xf32>
    %246 = arith.addf %245, %243 : vector<8x16xf32>
    %c0_136 = arith.constant 0 : index
    %c10_137 = arith.constant 10 : index
    %c0_138 = arith.constant 0 : index
    %c0_139 = arith.constant 0 : index
    %247 = vector.load %arg7[%c0_136, %c10_137, %c0_138, %c0_139] : memref<1x20x8x16xf32, #tpu.memory_space<vmem>>, vector<1x1x8x16xf32>
    %248 = vector.shape_cast %247 : vector<1x1x8x16xf32> to vector<8x16xf32>
    %249 = vector.shape_cast %246 : vector<8x16xf32> to vector<1x1x8x16xf32>
    tpu.vector_store %arg7[%c0_136, %c10_137, %c0_138, %c0_139], %249 {strides = array<i32>} : memref<1x20x8x16xf32, #tpu.memory_space<vmem>>, vector<1x1x8x16xf32>,
    %250 = arith.mulf %153, %155 : vector<16x16xf32>
    %251 = vector.shape_cast %250 : vector<16x16xf32> to vector<2x8x16xf32>
    %cst_140 = arith.constant dense<0.000000e+00> : vector<8x16xf32>
    %252 = vector.multi_reduction <add>, %251, %cst_140 [0] : vector<2x8x16xf32> to vector<8x16xf32>
    %c0_141 = arith.constant 0 : index
    %c11 = arith.constant 11 : index
    %c0_142 = arith.constant 0 : index
    %c0_143 = arith.constant 0 : index
    %253 = vector.load %arg7[%c0_141, %c11, %c0_142, %c0_143] : memref<1x20x8x16xf32, #tpu.memory_space<vmem>>, vector<1x1x8x16xf32>
    %254 = vector.shape_cast %253 : vector<1x1x8x16xf32> to vector<8x16xf32>
    %255 = arith.addf %254, %252 : vector<8x16xf32>
    %c0_144 = arith.constant 0 : index
    %c11_145 = arith.constant 11 : index
    %c0_146 = arith.constant 0 : index
    %c0_147 = arith.constant 0 : index
    %256 = vector.load %arg7[%c0_144, %c11_145, %c0_146, %c0_147] : memref<1x20x8x16xf32, #tpu.memory_space<vmem>>, vector<1x1x8x16xf32>
    %257 = vector.shape_cast %256 : vector<1x1x8x16xf32> to vector<8x16xf32>
    %258 = vector.shape_cast %255 : vector<8x16xf32> to vector<1x1x8x16xf32>
    tpu.vector_store %arg7[%c0_144, %c11_145, %c0_146, %c0_147], %258 {strides = array<i32>} : memref<1x20x8x16xf32, #tpu.memory_space<vmem>>, vector<1x1x8x16xf32>,
    %259 = arith.mulf %153, %139 : vector<16x16xf32>
    %260 = vector.shape_cast %259 : vector<16x16xf32> to vector<2x8x16xf32>
    %cst_148 = arith.constant dense<0.000000e+00> : vector<8x16xf32>
    %261 = vector.multi_reduction <add>, %260, %cst_148 [0] : vector<2x8x16xf32> to vector<8x16xf32>
    %c0_149 = arith.constant 0 : index
    %c12 = arith.constant 12 : index
    %c0_150 = arith.constant 0 : index
    %c0_151 = arith.constant 0 : index
    %262 = vector.load %arg7[%c0_149, %c12, %c0_150, %c0_151] : memref<1x20x8x16xf32, #tpu.memory_space<vmem>>, vector<1x1x8x16xf32>
    %263 = vector.shape_cast %262 : vector<1x1x8x16xf32> to vector<8x16xf32>
    %264 = arith.addf %263, %261 : vector<8x16xf32>
    %c0_152 = arith.constant 0 : index
    %c12_153 = arith.constant 12 : index
    %c0_154 = arith.constant 0 : index
    %c0_155 = arith.constant 0 : index
    %265 = vector.load %arg7[%c0_152, %c12_153, %c0_154, %c0_155] : memref<1x20x8x16xf32, #tpu.memory_space<vmem>>, vector<1x1x8x16xf32>
    %266 = vector.shape_cast %265 : vector<1x1x8x16xf32> to vector<8x16xf32>
    %267 = vector.shape_cast %264 : vector<8x16xf32> to vector<1x1x8x16xf32>
    tpu.vector_store %arg7[%c0_152, %c12_153, %c0_154, %c0_155], %267 {strides = array<i32>} : memref<1x20x8x16xf32, #tpu.memory_space<vmem>>, vector<1x1x8x16xf32>,
    %268 = arith.mulf %153, %143 : vector<16x16xf32>
    %269 = vector.shape_cast %268 : vector<16x16xf32> to vector<2x8x16xf32>
    %cst_156 = arith.constant dense<0.000000e+00> : vector<8x16xf32>
    %270 = vector.multi_reduction <add>, %269, %cst_156 [0] : vector<2x8x16xf32> to vector<8x16xf32>
    %c0_157 = arith.constant 0 : index
    %c13 = arith.constant 13 : index
    %c0_158 = arith.constant 0 : index
    %c0_159 = arith.constant 0 : index
    %271 = vector.load %arg7[%c0_157, %c13, %c0_158, %c0_159] : memref<1x20x8x16xf32, #tpu.memory_space<vmem>>, vector<1x1x8x16xf32>
    %272 = vector.shape_cast %271 : vector<1x1x8x16xf32> to vector<8x16xf32>
    %273 = arith.addf %272, %270 : vector<8x16xf32>
    %c0_160 = arith.constant 0 : index
    %c13_161 = arith.constant 13 : index
    %c0_162 = arith.constant 0 : index
    %c0_163 = arith.constant 0 : index
    %274 = vector.load %arg7[%c0_160, %c13_161, %c0_162, %c0_163] : memref<1x20x8x16xf32, #tpu.memory_space<vmem>>, vector<1x1x8x16xf32>
    %275 = vector.shape_cast %274 : vector<1x1x8x16xf32> to vector<8x16xf32>
    %276 = vector.shape_cast %273 : vector<8x16xf32> to vector<1x1x8x16xf32>
    tpu.vector_store %arg7[%c0_160, %c13_161, %c0_162, %c0_163], %276 {strides = array<i32>} : memref<1x20x8x16xf32, #tpu.memory_space<vmem>>, vector<1x1x8x16xf32>,
    %277 = arith.mulf %155, %155 : vector<16x16xf32>
    %278 = vector.shape_cast %277 : vector<16x16xf32> to vector<2x8x16xf32>
    %cst_164 = arith.constant dense<0.000000e+00> : vector<8x16xf32>
    %279 = vector.multi_reduction <add>, %278, %cst_164 [0] : vector<2x8x16xf32> to vector<8x16xf32>
    %c0_165 = arith.constant 0 : index
    %c14 = arith.constant 14 : index
    %c0_166 = arith.constant 0 : index
    %c0_167 = arith.constant 0 : index
    %280 = vector.load %arg7[%c0_165, %c14, %c0_166, %c0_167] : memref<1x20x8x16xf32, #tpu.memory_space<vmem>>, vector<1x1x8x16xf32>
    %281 = vector.shape_cast %280 : vector<1x1x8x16xf32> to vector<8x16xf32>
    %282 = arith.addf %281, %279 : vector<8x16xf32>
    %c0_168 = arith.constant 0 : index
    %c14_169 = arith.constant 14 : index
    %c0_170 = arith.constant 0 : index
    %c0_171 = arith.constant 0 : index
    %283 = vector.load %arg7[%c0_168, %c14_169, %c0_170, %c0_171] : memref<1x20x8x16xf32, #tpu.memory_space<vmem>>, vector<1x1x8x16xf32>
    %284 = vector.shape_cast %283 : vector<1x1x8x16xf32> to vector<8x16xf32>
    %285 = vector.shape_cast %282 : vector<8x16xf32> to vector<1x1x8x16xf32>
    tpu.vector_store %arg7[%c0_168, %c14_169, %c0_170, %c0_171], %285 {strides = array<i32>} : memref<1x20x8x16xf32, #tpu.memory_space<vmem>>, vector<1x1x8x16xf32>,
    %286 = arith.mulf %155, %139 : vector<16x16xf32>
    %287 = vector.shape_cast %286 : vector<16x16xf32> to vector<2x8x16xf32>
    %cst_172 = arith.constant dense<0.000000e+00> : vector<8x16xf32>
    %288 = vector.multi_reduction <add>, %287, %cst_172 [0] : vector<2x8x16xf32> to vector<8x16xf32>
    %c0_173 = arith.constant 0 : index
    %c15 = arith.constant 15 : index
    %c0_174 = arith.constant 0 : index
    %c0_175 = arith.constant 0 : index
    %289 = vector.load %arg7[%c0_173, %c15, %c0_174, %c0_175] : memref<1x20x8x16xf32, #tpu.memory_space<vmem>>, vector<1x1x8x16xf32>
    %290 = vector.shape_cast %289 : vector<1x1x8x16xf32> to vector<8x16xf32>
    %291 = arith.addf %290, %288 : vector<8x16xf32>
    %c0_176 = arith.constant 0 : index
    %c15_177 = arith.constant 15 : index
    %c0_178 = arith.constant 0 : index
    %c0_179 = arith.constant 0 : index
    %292 = vector.load %arg7[%c0_176, %c15_177, %c0_178, %c0_179] : memref<1x20x8x16xf32, #tpu.memory_space<vmem>>, vector<1x1x8x16xf32>
    %293 = vector.shape_cast %292 : vector<1x1x8x16xf32> to vector<8x16xf32>
    %294 = vector.shape_cast %291 : vector<8x16xf32> to vector<1x1x8x16xf32>
    tpu.vector_store %arg7[%c0_176, %c15_177, %c0_178, %c0_179], %294 {strides = array<i32>} : memref<1x20x8x16xf32, #tpu.memory_space<vmem>>, vector<1x1x8x16xf32>,
    %295 = arith.mulf %155, %143 : vector<16x16xf32>
    %296 = vector.shape_cast %295 : vector<16x16xf32> to vector<2x8x16xf32>
    %cst_180 = arith.constant dense<0.000000e+00> : vector<8x16xf32>
    %297 = vector.multi_reduction <add>, %296, %cst_180 [0] : vector<2x8x16xf32> to vector<8x16xf32>
    %c0_181 = arith.constant 0 : index
    %c16 = arith.constant 16 : index
    %c0_182 = arith.constant 0 : index
    %c0_183 = arith.constant 0 : index
    %298 = vector.load %arg7[%c0_181, %c16, %c0_182, %c0_183] : memref<1x20x8x16xf32, #tpu.memory_space<vmem>>, vector<1x1x8x16xf32>
    %299 = vector.shape_cast %298 : vector<1x1x8x16xf32> to vector<8x16xf32>
    %300 = arith.addf %299, %297 : vector<8x16xf32>
    %c0_184 = arith.constant 0 : index
    %c16_185 = arith.constant 16 : index
    %c0_186 = arith.constant 0 : index
    %c0_187 = arith.constant 0 : index
    %301 = vector.load %arg7[%c0_184, %c16_185, %c0_186, %c0_187] : memref<1x20x8x16xf32, #tpu.memory_space<vmem>>, vector<1x1x8x16xf32>
    %302 = vector.shape_cast %301 : vector<1x1x8x16xf32> to vector<8x16xf32>
    %303 = vector.shape_cast %300 : vector<8x16xf32> to vector<1x1x8x16xf32>
    tpu.vector_store %arg7[%c0_184, %c16_185, %c0_186, %c0_187], %303 {strides = array<i32>} : memref<1x20x8x16xf32, #tpu.memory_space<vmem>>, vector<1x1x8x16xf32>,
    %304 = arith.mulf %139, %139 : vector<16x16xf32>
    %305 = vector.shape_cast %304 : vector<16x16xf32> to vector<2x8x16xf32>
    %cst_188 = arith.constant dense<0.000000e+00> : vector<8x16xf32>
    %306 = vector.multi_reduction <add>, %305, %cst_188 [0] : vector<2x8x16xf32> to vector<8x16xf32>
    %c0_189 = arith.constant 0 : index
    %c17 = arith.constant 17 : index
    %c0_190 = arith.constant 0 : index
    %c0_191 = arith.constant 0 : index
    %307 = vector.load %arg7[%c0_189, %c17, %c0_190, %c0_191] : memref<1x20x8x16xf32, #tpu.memory_space<vmem>>, vector<1x1x8x16xf32>
    %308 = vector.shape_cast %307 : vector<1x1x8x16xf32> to vector<8x16xf32>
    %309 = arith.addf %308, %306 : vector<8x16xf32>
    %c0_192 = arith.constant 0 : index
    %c17_193 = arith.constant 17 : index
    %c0_194 = arith.constant 0 : index
    %c0_195 = arith.constant 0 : index
    %310 = vector.load %arg7[%c0_192, %c17_193, %c0_194, %c0_195] : memref<1x20x8x16xf32, #tpu.memory_space<vmem>>, vector<1x1x8x16xf32>
    %311 = vector.shape_cast %310 : vector<1x1x8x16xf32> to vector<8x16xf32>
    %312 = vector.shape_cast %309 : vector<8x16xf32> to vector<1x1x8x16xf32>
    tpu.vector_store %arg7[%c0_192, %c17_193, %c0_194, %c0_195], %312 {strides = array<i32>} : memref<1x20x8x16xf32, #tpu.memory_space<vmem>>, vector<1x1x8x16xf32>,
    %313 = arith.mulf %139, %143 : vector<16x16xf32>
    %314 = vector.shape_cast %313 : vector<16x16xf32> to vector<2x8x16xf32>
    %cst_196 = arith.constant dense<0.000000e+00> : vector<8x16xf32>
    %315 = vector.multi_reduction <add>, %314, %cst_196 [0] : vector<2x8x16xf32> to vector<8x16xf32>
    %c0_197 = arith.constant 0 : index
    %c18 = arith.constant 18 : index
    %c0_198 = arith.constant 0 : index
    %c0_199 = arith.constant 0 : index
    %316 = vector.load %arg7[%c0_197, %c18, %c0_198, %c0_199] : memref<1x20x8x16xf32, #tpu.memory_space<vmem>>, vector<1x1x8x16xf32>
    %317 = vector.shape_cast %316 : vector<1x1x8x16xf32> to vector<8x16xf32>
    %318 = arith.addf %317, %315 : vector<8x16xf32>
    %c0_200 = arith.constant 0 : index
    %c18_201 = arith.constant 18 : index
    %c0_202 = arith.constant 0 : index
    %c0_203 = arith.constant 0 : index
    %319 = vector.load %arg7[%c0_200, %c18_201, %c0_202, %c0_203] : memref<1x20x8x16xf32, #tpu.memory_space<vmem>>, vector<1x1x8x16xf32>
    %320 = vector.shape_cast %319 : vector<1x1x8x16xf32> to vector<8x16xf32>
    %321 = vector.shape_cast %318 : vector<8x16xf32> to vector<1x1x8x16xf32>
    tpu.vector_store %arg7[%c0_200, %c18_201, %c0_202, %c0_203], %321 {strides = array<i32>} : memref<1x20x8x16xf32, #tpu.memory_space<vmem>>, vector<1x1x8x16xf32>,
    %322 = arith.mulf %143, %143 : vector<16x16xf32>
    %323 = vector.shape_cast %322 : vector<16x16xf32> to vector<2x8x16xf32>
    %cst_204 = arith.constant dense<0.000000e+00> : vector<8x16xf32>
    %324 = vector.multi_reduction <add>, %323, %cst_204 [0] : vector<2x8x16xf32> to vector<8x16xf32>
    %c0_205 = arith.constant 0 : index
    %c19 = arith.constant 19 : index
    %c0_206 = arith.constant 0 : index
    %c0_207 = arith.constant 0 : index
    %325 = vector.load %arg7[%c0_205, %c19, %c0_206, %c0_207] : memref<1x20x8x16xf32, #tpu.memory_space<vmem>>, vector<1x1x8x16xf32>
    %326 = vector.shape_cast %325 : vector<1x1x8x16xf32> to vector<8x16xf32>
    %327 = arith.addf %326, %324 : vector<8x16xf32>
    %c0_208 = arith.constant 0 : index
    %c19_209 = arith.constant 19 : index
    %c0_210 = arith.constant 0 : index
    %c0_211 = arith.constant 0 : index
    %328 = vector.load %arg7[%c0_208, %c19_209, %c0_210, %c0_211] : memref<1x20x8x16xf32, #tpu.memory_space<vmem>>, vector<1x1x8x16xf32>
    %329 = vector.shape_cast %328 : vector<1x1x8x16xf32> to vector<8x16xf32>
    %330 = vector.shape_cast %327 : vector<8x16xf32> to vector<1x1x8x16xf32>
    tpu.vector_store %arg7[%c0_208, %c19_209, %c0_210, %c0_211], %330 {strides = array<i32>} : memref<1x20x8x16xf32, #tpu.memory_space<vmem>>, vector<1x1x8x16xf32>,
    return
  }
  func.func @transform_0(%arg0: i32, %arg1: i32) -> (i32, i32) {
    %c0_i32 = arith.constant 0 : i32
    %c0_i32_0 = arith.constant 0 : i32
    %c0_i32_1 = arith.constant 0 : i32
    return %c0_i32, %c0_i32_0 : i32, i32
  }
  func.func @transform_1(%arg0: i32, %arg1: i32) -> (i32, i32) {
    %c0_i32 = arith.constant 0 : i32
    %c0_i32_0 = arith.constant 0 : i32
    %c0_i32_1 = arith.constant 0 : i32
    return %c0_i32, %c0_i32_0 : i32, i32
  }
  func.func @transform_2(%arg0: i32, %arg1: i32) -> (i32, i32) {
    %c0_i32 = arith.constant 0 : i32
    %c0_i32_0 = arith.constant 0 : i32
    %c0_i32_1 = arith.constant 0 : i32
    return %c0_i32, %c0_i32_0 : i32, i32
  }
  func.func @transform_3(%arg0: i32, %arg1: i32) -> (i32, i32, i32, i32) {
    %c0_i32 = arith.constant 0 : i32
    %c0_i32_0 = arith.constant 0 : i32
    %c0_i32_1 = arith.constant 0 : i32
    return %arg0, %c0_i32, %arg1, %c0_i32_0 : i32, i32, i32, i32
  }
  func.func @transform_4(%arg0: i32, %arg1: i32) -> (i32, i32, i32, i32) {
    %c0_i32 = arith.constant 0 : i32
    %c0_i32_0 = arith.constant 0 : i32
    %c0_i32_1 = arith.constant 0 : i32
    return %arg0, %c0_i32, %arg1, %c0_i32_0 : i32, i32, i32, i32
  }
  func.func @transform_5(%arg0: i32, %arg1: i32) -> (i32, i32, i32, i32) {
    %c0_i32 = arith.constant 0 : i32
    %c0_i32_0 = arith.constant 0 : i32
    %c0_i32_1 = arith.constant 0 : i32
    %c0_i32_2 = arith.constant 0 : i32
    return %arg0, %c0_i32, %c0_i32_0, %c0_i32_1 : i32, i32, i32, i32
  }
}

</mosaic_0001>

<llo_original>
// kernel: tpu_custom_call.1
$region0: #{tpu_custom_call.1}
  #allocation0 [shape = 'u32[]', space=smem, size = 0x4, offset = 0x4, fixed_abs, tag = 'smem constant byte address 0x4 - core index']
  #allocation1 [shape = 'u32[144,128]{1,0:T(1,128)}', space=vmem, size = 0x12000, scoped, tag = 'internal scratch']
  %s0 = inlined_call_operand.hbm [shape: f32[2,8], index: 0, kind: input, shape index: {}]
  %s1 = inlined_call_operand.vmem [shape: f32[2,8], index: 1, kind: input, shape index: {}]
  %s2 = inlined_call_operand.vmem [shape: f32[2,8], index: 2, kind: input, shape index: {}]
  %s3 = inlined_call_operand.hbm [shape: f32[2,3,16,16], index: 3, kind: input, shape index: {}]
  %s4 = inlined_call_operand.hbm [shape: f32[2,2,16,16], index: 4, kind: output, shape index: {0}]
  %s5 = inlined_call_operand.vmem [shape: f32[2,20,8,16], index: 5, kind: output, shape index: {1}]
  %6 = xla_tuple %s4, %s5
  %s7 = sld [smem:[#allocation0]]
  $region77: #{tpu_custom_call.1} parent=0
    _
  %s9 = ssub.s32 1, %s7
  %s10 = scalar_select 0, %s9, %s7
  $region1: #{tpu_custom_call.1} parent=0
    #allocation2 [shape = 'u8[1024]{0}', space=smem, size = 0x400, scoped, tag = 'input window, operand 0, single buffered']
    #allocation3 [shape = 's32[2]{0}', space=sflag, size = 0x8, scoped, tag = 'scoped memory for tpu_custom_call.1']
    #allocation4 [shape = 's32[2]{0}', space=sflag, size = 0x8, scoped, tag = 'scoped memory for tpu_custom_call.1']
    #allocation5 [shape = 's32[2]{0}', space=sflag, size = 0x8, scoped, tag = 'scoped memory for tpu_custom_call.1']
    #allocation6 [shape = 's32[2]{0}', space=sflag, size = 0x8, scoped, tag = 'scoped memory for tpu_custom_call.1']
    #allocation7 [shape = 'u8[1024]{0}', space=smem, size = 0x400, scoped, tag = 'input window, operand 1, single buffered']
    #allocation8 [shape = 'u8[1024]{0}', space=smem, size = 0x400, scoped, tag = 'input window, operand 2, single buffered']
    #allocation9 [shape = 's32[1]{0}', space=sflag, size = 0x4, scoped, tag = 'scoped memory for tpu_custom_call.1']
    #allocation10 [shape = 'u8[49152]{0}', space=vmem, size = 0xc000, scoped, tag = 'input window, operand 3']
    #allocation11 [shape = 'u8[32768]{0}', space=vmem, size = 0x8000, scoped, tag = 'output window, operand 0']
    %11 = vsyncpa [#allocation5], 0
    %12 = vsyncpa [#allocation6], 0
    %13 = vsyncpa [#allocation9], 0
    %14 = vsyncpa [#allocation3], 0
    %s15 = scalar_lea.sflag [#allocation3], 1
    %16 = vsyncpa %s15, 0
    %17 = vsyncpa [#allocation4], 0
    %s18 = scalar_lea.sflag [#allocation4], 1
    %19 = vsyncpa %s18, 0
    loop: start=0, step=1, limit=4
    $region2: #{tpu_custom_call.1} parent=1 // loop_pre_header
      _
    $region3: #{tpu_custom_call.1} parent=1 // loop_header
      %s21 = sphi 0, %s25
      %p22 = scmp.ge.s32.totalorder %s21, 4
      %s28 = sphi 0, %s40
      %s29 = sphi 0, %s36
      %s30 = sphi 0, %s28
      %s31 = sphi 0, %s29
      %s32 = sphi 0, %s30
      %s33 = sphi 0, %s31
      %s41 = sphi 0, %s41
      %s43 = sphi 0, %s41
      %s44 = sphi 0, %s43
      %s58 = sphi 0, %s44
      %s62 = sphi 0, %s62
      %s64 = sphi 0, %s62
      %s65 = sphi 0, %s64
      %s79 = sphi 0, %s65
      %s83 = sphi 0, %s83
      %s85 = sphi 0, %s83
      %s86 = sphi 0, %s85
      %s100 = sphi 0, %s86
      %s108 = sphi 0, %s110
      %s111 = sphi 0, %s108
      %s112 = sphi 0, %s111
      %s128 = sphi 0, %s112
      %s136 = sphi 0, %s138
      %s139 = sphi 0, %s136
      %s140 = sphi 0, %s139
      %s156 = sphi 0, %s140
      %s162 = sphi 0, %s164
      %s165 = sphi 0, %s162
      %s166 = sphi 0, %s165
      %s182 = sphi 0, %s166
    $region4: #{tpu_custom_call.1} parent=1 // loop_header_branch
      %24 = sbr.rel (%p22) target = $region8
    $region5: #{tpu_custom_call.1} parent=1 // loop_body
      %s26 = ssub.s32 %s21, 1
      %s27 = ssub.s32 %s21, 2
      %s34 = sadd.s32 1, %s29
      %p35 = scmp.ge.s32.totalorder %s34, 1
      %s36 = scalar_select %p35, 0, %s34
      %s37 = sadd.s32 1, %s28
      %s38 = scalar_select %p35, %s37, %s28
      %p39 = scmp.ge.s32.totalorder %s38, 2
      %s40 = scalar_select %p39, 0, %s38
      %s42 = sadd.s32 %s41, 1
      %p45 = scmp.eq.s32.totalorder %s21, 1
      %p46 = scmp.ne.s32.totalorder %s41, %s43
      %p47 = scmp.eq.s32.totalorder %s21, 0
      %p48 = por %p46, %p47
      %p49 = scmp.ne.s32.totalorder %s41, %s43
      %p50 = scmp.eq.s32.totalorder %s26, 1
      %p51 = por %p49, %p50
      %p52 = scmp.ne.s32.totalorder %s43, %s44
      %p53 = scmp.eq.s32.totalorder %s26, 0
      %p54 = por %p52, %p53
      %p55 = scmp.ne.s32.totalorder %s43, %s44
      %p56 = scmp.eq.s32.totalorder %s27, 1
      %p57 = por %p55, %p56
      %p59 = scmp.ne.s32.totalorder %s44, %s58
      %p60 = scmp.eq.s32.totalorder %s27, 0
      %p61 = por %p59, %p60
      %s63 = sadd.s32 %s62, 1
      %p66 = scmp.eq.s32.totalorder %s21, 1
      %p67 = scmp.ne.s32.totalorder %s62, %s64
      %p68 = scmp.eq.s32.totalorder %s21, 0
      %p69 = por %p67, %p68
      %p70 = scmp.ne.s32.totalorder %s62, %s64
      %p71 = scmp.eq.s32.totalorder %s26, 1
      %p72 = por %p70, %p71
      %p73 = scmp.ne.s32.totalorder %s64, %s65
      %p74 = scmp.eq.s32.totalorder %s26, 0
      %p75 = por %p73, %p74
      %p76 = scmp.ne.s32.totalorder %s64, %s65
      %p77 = scmp.eq.s32.totalorder %s27, 1
      %p78 = por %p76, %p77
      %p80 = scmp.ne.s32.totalorder %s65, %s79
      %p81 = scmp.eq.s32.totalorder %s27, 0
      %p82 = por %p80, %p81
      %s84 = sadd.s32 %s83, 1
      %p87 = scmp.eq.s32.totalorder %s21, 1
      %p88 = scmp.ne.s32.totalorder %s83, %s85
      %p89 = scmp.eq.s32.totalorder %s21, 0
      %p90 = por %p88, %p89
      %p91 = scmp.ne.s32.totalorder %s83, %s85
      %p92 = scmp.eq.s32.totalorder %s26, 1
      %p93 = por %p91, %p92
      %p94 = scmp.ne.s32.totalorder %s85, %s86
      %p95 = scmp.eq.s32.totalorder %s26, 0
      %p96 = por %p94, %p95
      %p97 = scmp.ne.s32.totalorder %s85, %s86
      %p98 = scmp.eq.s32.totalorder %s27, 1
      %p99 = por %p97, %p98
      %p101 = scmp.ne.s32.totalorder %s86, %s100
      %p102 = scmp.eq.s32.totalorder %s27, 0
      %p103 = por %p101, %p102
      %s104 = ssub.s32 %s28, %s40
      %s105 = ssub.s32 %s29, %s36
      %s106 = sor.u32 %s104, %s105
      %p107 = scmp.eq.s32.totalorder %s106, 0
      %s109 = sadd.s32 %s108, 1
      %s110 = scalar_select %p107, %s108, %s109
      %p113 = pneg %p107
      %p114 = scmp.eq.s32.totalorder %s21, 1
      %p115 = por %p113, %p114
      %p116 = scmp.ne.s32.totalorder %s108, %s111
      %p117 = scmp.eq.s32.totalorder %s21, 0
      %p118 = por %p116, %p117
      %p119 = scmp.ne.s32.totalorder %s108, %s111
      %p120 = scmp.eq.s32.totalorder %s26, 1
      %p121 = por %p119, %p120
      %p122 = scmp.ne.s32.totalorder %s111, %s112
      %p123 = scmp.eq.s32.totalorder %s26, 0
      %p124 = por %p122, %p123
      %p125 = scmp.ne.s32.totalorder %s111, %s112
      %p126 = scmp.eq.s32.totalorder %s27, 1
      %p127 = por %p125, %p126
      %p129 = scmp.ne.s32.totalorder %s112, %s128
      %p130 = scmp.eq.s32.totalorder %s27, 0
      %p131 = por %p129, %p130
      %s132 = ssub.s32 %s28, %s40
      %s133 = ssub.s32 %s29, %s36
      %s134 = sor.u32 %s132, %s133
      %p135 = scmp.eq.s32.totalorder %s134, 0
      %s137 = sadd.s32 %s136, 1
      %s138 = scalar_select %p135, %s136, %s137
      %p141 = pneg %p135
      %p142 = scmp.eq.s32.totalorder %s21, 1
      %p143 = por %p141, %p142
      %p144 = scmp.ne.s32.totalorder %s136, %s139
      %p145 = scmp.eq.s32.totalorder %s21, 0
      %p146 = por %p144, %p145
      %p147 = scmp.ne.s32.totalorder %s136, %s139
      %p148 = scmp.eq.s32.totalorder %s26, 1
      %p149 = por %p147, %p148
      %p150 = scmp.ne.s32.totalorder %s139, %s140
      %p151 = scmp.eq.s32.totalorder %s26, 0
      %p152 = por %p150, %p151
      %p153 = scmp.ne.s32.totalorder %s139, %s140
      %p154 = scmp.eq.s32.totalorder %s27, 1
      %p155 = por %p153, %p154
      %p157 = scmp.ne.s32.totalorder %s140, %s156
      %p158 = scmp.eq.s32.totalorder %s27, 0
      %p159 = por %p157, %p158
      %s160 = ssub.s32 %s28, %s40
      %p161 = scmp.eq.s32.totalorder %s160, 0
      %s163 = sadd.s32 %s162, 1
      %s164 = scalar_select %p161, %s162, %s163
      %p167 = pneg %p161
      %p168 = scmp.eq.s32.totalorder %s21, 1
      %p169 = por %p167, %p168
      %p170 = scmp.ne.s32.totalorder %s162, %s165
      %p171 = scmp.eq.s32.totalorder %s21, 0
      %p172 = por %p170, %p171
      %p173 = scmp.ne.s32.totalorder %s162, %s165
      %p174 = scmp.eq.s32.totalorder %s26, 1
      %p175 = por %p173, %p174
      %p176 = scmp.ne.s32.totalorder %s165, %s166
      %p177 = scmp.eq.s32.totalorder %s26, 0
      %p178 = por %p176, %p177
      %p179 = scmp.ne.s32.totalorder %s165, %s166
      %p180 = scmp.eq.s32.totalorder %s27, 1
      %p181 = por %p179, %p180
      %p183 = scmp.ne.s32.totalorder %s166, %s182
      %p184 = scmp.eq.s32.totalorder %s27, 0
      %p185 = por %p183, %p184
      %p186 = scmp.le.s32.totalorder 1, %s21
      %p187 = scmp.lt.s32.totalorder %s21, 3
      %p188 = pnand %p186, %p187
      %p189 = pneg %p188
      // Predicated region
      $region9: #{tpu_custom_call.1} parent=5 // pred_check
        _
      $region10: #{tpu_custom_call.1} parent=5 // pred_check_branch
        %191 = sbr.rel (%p188) target = $region12
      $region11: #{tpu_custom_call.1} parent=5 // pred_region
        %s192 = ssub.s32 %s21, 1
        // Predicated region
        $region13: #{tpu_custom_call.1} parent=11 // pred_check
          %p193 = pneg %p54
        $region14: #{tpu_custom_call.1} parent=11 // pred_check_branch
          %195 = sbr.rel (%p193) target = $region16
        $region15: #{tpu_custom_call.1} parent=11 // pred_region
          %s197 = ssub.s32 32, 32
          %198 = vsyncadd [#allocation5], %s197
          %201 = dma.hbm_to_smem %s0, 32, [#allocation2], [#allocation5]
        $region16: #{tpu_custom_call.1} parent=11 // pred_fallthru
          _
        // Predicated region
        $region17: #{tpu_custom_call.1} parent=11 // pred_check
          %p202 = pneg %p75
        $region18: #{tpu_custom_call.1} parent=11 // pred_check_branch
          %204 = sbr.rel (%p202) target = $region20
        $region19: #{tpu_custom_call.1} parent=11 // pred_region
          %s206 = ssub.s32 32, 32
          %207 = vsyncadd [#allocation6], %s206
          %s209 = sshll.u32 %s1, 4
          %s210 = int_to_ptr.vmem [resolvable:$true] %s209
          %212 = dma.vmem_to_smem %s210, 32, [#allocation7], [#allocation6]
        $region20: #{tpu_custom_call.1} parent=11 // pred_fallthru
          _
        // Predicated region
        $region21: #{tpu_custom_call.1} parent=11 // pred_check
          %p213 = pneg %p96
        $region22: #{tpu_custom_call.1} parent=11 // pred_check_branch
          %215 = sbr.rel (%p213) target = $region24
        $region23: #{tpu_custom_call.1} parent=11 // pred_region
          %s217 = ssub.s32 32, 32
          %218 = vsyncadd [#allocation9], %s217
          %s220 = sshll.u32 %s2, 4
          %s221 = int_to_ptr.vmem [resolvable:$true] %s220
          %223 = dma.vmem_to_smem %s221, 32, [#allocation8], [#allocation9]
        $region24: #{tpu_custom_call.1} parent=11 // pred_fallthru
          _
      $region12: #{tpu_custom_call.1} parent=5 // pred_fallthru
        _
      %p224 = scmp.lt.s32.totalorder %s21, 2
      // Predicated region
      $region25: #{tpu_custom_call.1} parent=5 // pred_check
        %p225 = pneg %p224
      $region26: #{tpu_custom_call.1} parent=5 // pred_check_branch
        %227 = sbr.rel (%p225) target = $region28
      $region27: #{tpu_custom_call.1} parent=5 // pred_region
        // Predicated region
        $region29: #{tpu_custom_call.1} parent=27 // pred_check
          %p228 = pneg %p118
        $region30: #{tpu_custom_call.1} parent=27 // pred_check_branch
          %230 = sbr.rel (%p228) target = $region32
        $region31: #{tpu_custom_call.1} parent=27 // pred_region
          %s231 = sand.u32 %s108, 1
          %s232 = scalar_lea.sflag [#allocation3], %s231
          %s233 = sand.u32 %s108, 1
          %s234 = smul.addr %s233, 48
          %s235 = scalar_lea.vmem [#allocation10], %s234
          %s236 = smul.u32 2, %s29
          %s238 = ssub.s32 768, 768
          %239 = vsyncadd %s232, %s238
          %s240 = smul.addr %s28, 6
          %s241 = sadd.s32 %s236, %s240
          %s242 = smul.addr %s241, 128
          %s243 = scalar_lea.hbm %s3, %s242
          %s244 = sshll.u32 %s235, 4
          %s245 = int_to_ptr.vmem [resolvable:$true] %s244
          %250 = dma.hbm_to_vmem [thread:$0]  %s243, 768, %s245, %s232, 128, 128, 8
        $region32: #{tpu_custom_call.1} parent=27 // pred_fallthru
          _
      $region28: #{tpu_custom_call.1} parent=5 // pred_fallthru
        _
      %p251 = scmp.le.s32.totalorder 1, %s21
      %p252 = scmp.lt.s32.totalorder %s21, 3
      %p253 = pnand %p251, %p252
      %p254 = pneg %p253
      // Predicated region
      $region33: #{tpu_custom_call.1} parent=5 // pred_check
        _
      $region34: #{tpu_custom_call.1} parent=5 // pred_check_branch
        %256 = sbr.rel (%p253) target = $region36
      $region35: #{tpu_custom_call.1} parent=5 // pred_region
        %s257 = ssub.s32 %s21, 1
        // Predicated region
        $region37: #{tpu_custom_call.1} parent=35 // pred_check
          %p258 = pneg %p54
        $region38: #{tpu_custom_call.1} parent=35 // pred_check_branch
          %260 = sbr.rel (%p258) target = $region40
        $region39: #{tpu_custom_call.1} parent=35 // pred_region
          %261 = dma.done [#allocation5], 32
        $region40: #{tpu_custom_call.1} parent=35 // pred_fallthru
          _
        // Predicated region
        $region41: #{tpu_custom_call.1} parent=35 // pred_check
          %p262 = pneg %p75
        $region42: #{tpu_custom_call.1} parent=35 // pred_check_branch
          %264 = sbr.rel (%p262) target = $region44
        $region43: #{tpu_custom_call.1} parent=35 // pred_region
          %265 = dma.done [#allocation6], 32
        $region44: #{tpu_custom_call.1} parent=35 // pred_fallthru
          _
        // Predicated region
        $region45: #{tpu_custom_call.1} parent=35 // pred_check
          %p266 = pneg %p96
        $region46: #{tpu_custom_call.1} parent=35 // pred_check_branch
          %268 = sbr.rel (%p266) target = $region48
        $region47: #{tpu_custom_call.1} parent=35 // pred_region
          %269 = dma.done [#allocation9], 32
        $region48: #{tpu_custom_call.1} parent=35 // pred_fallthru
          _
        %s270 = sand.u32 %s111, 1
        %s271 = scalar_lea.sflag [#allocation3], %s270
        %s272 = sand.u32 %s111, 1
        %s273 = smul.addr %s272, 48
        %s274 = scalar_lea.vmem [#allocation10], %s273
        // Predicated region
        $region49: #{tpu_custom_call.1} parent=35 // pred_check
          %p275 = pneg %p124
        $region50: #{tpu_custom_call.1} parent=35 // pred_check_branch
          %277 = sbr.rel (%p275) target = $region52
        $region51: #{tpu_custom_call.1} parent=35 // pred_region
          %278 = dma.done %s271, 768
        $region52: #{tpu_custom_call.1} parent=35 // pred_fallthru
          _
        %279 = sfence
        %p280 = pneg %p54
        %p281 = pneg %p51
        %p282 = pneg %p75
        %p283 = pneg %p72
        %p284 = pneg %p96
        %p285 = pneg %p93
        %s286 = sand.u32 %s111, 1
        %s287 = scalar_lea.sflag [#allocation3], %s286
        %s288 = sand.u32 %s111, 1
        %s289 = smul.addr %s288, 48
        %s290 = scalar_lea.vmem [#allocation10], %s289
        %p291 = pneg %p124
        %p292 = pneg %p121
        %p293 = pneg %p152
        %p294 = pneg %p149
        %s295 = sand.u32 %s139, 1
        %s296 = scalar_lea.sflag [#allocation4], %s295
        %s297 = sand.u32 %s139, 1
        %s298 = smul.addr %s297, 32
        %s299 = scalar_lea.vmem [#allocation11], %s298
        %p300 = pneg %p178
        %p301 = pneg %p175
        %p302 = scmp.lt.s32.totalorder %s30, 1
        %s303 = scalar_select %p302, %s30, 1
        %s304 = smul.addr %s303, 20
        %s305 = smul.addr %s304, 8
        %s306 = scalar_lea.vmem %s5, %s305
        %s307 = smul.u32 2, %s31
        %s308 = smul.u32 2, %s31
        %p309 = scmp.lt.s32.totalorder %s30, 1
        %s310 = scalar_select %p309, %s30, 1
        %s311 = smul.addr %s310, 20
        %s312 = smul.addr %s311, 8
        %s313 = scalar_lea.vmem %s5, %s312
        %p314 = scmp.eq.s32.totalorder %s31, 0
        // Predicated region
        $region53: #{tpu_custom_call.1} parent=35 // pred_check
          %p315 = pneg %p314
        $region54: #{tpu_custom_call.1} parent=35 // pred_check_branch
          %317 = sbr.rel (%p315) target = $region56
        $region55: #{tpu_custom_call.1} parent=35 // pred_region
          %vm318 = vcmask 130048
          %319 = vst.msk [vmem:[%s313] sm:$0xff] %vm318, 0.0
          %320 = vst.msk [vmem:[%s313 + $0x8] sm:$0xff] %vm318, 0.0
          %321 = vst.msk [vmem:[%s313 + $0x10] sm:$0xff] %vm318, 0.0
          %322 = vst.msk [vmem:[%s313 + $0x18] sm:$0xff] %vm318, 0.0
          %323 = vst.msk [vmem:[%s313 + $0x20] sm:$0xff] %vm318, 0.0
          %324 = vst.msk [vmem:[%s313 + $0x28] sm:$0xff] %vm318, 0.0
          %325 = vst.msk [vmem:[%s313 + $0x30] sm:$0xff] %vm318, 0.0
          %326 = vst.msk [vmem:[%s313 + $0x38] sm:$0xff] %vm318, 0.0
          %327 = vst.msk [vmem:[%s313 + $0x40] sm:$0xff] %vm318, 0.0
          %328 = vst.msk [vmem:[%s313 + $0x48] sm:$0xff] %vm318, 0.0
          %329 = vst.msk [vmem:[%s313 + $0x50] sm:$0xff] %vm318, 0.0
          %330 = vst.msk [vmem:[%s313 + $0x58] sm:$0xff] %vm318, 0.0
          %331 = vst.msk [vmem:[%s313 + $0x60] sm:$0xff] %vm318, 0.0
          %332 = vst.msk [vmem:[%s313 + $0x68] sm:$0xff] %vm318, 0.0
          %333 = vst.msk [vmem:[%s313 + $0x70] sm:$0xff] %vm318, 0.0
          %334 = vst.msk [vmem:[%s313 + $0x78] sm:$0xff] %vm318, 0.0
          %335 = vst.msk [vmem:[%s313 + $0x80] sm:$0xff] %vm318, 0.0
          %336 = vst.msk [vmem:[%s313 + $0x88] sm:$0xff] %vm318, 0.0
          %337 = vst.msk [vmem:[%s313 + $0x90] sm:$0xff] %vm318, 0.0
          %338 = vst.msk [vmem:[%s313 + $0x98] sm:$0xff] %vm318, 0.0
        $region56: #{tpu_custom_call.1} parent=35 // pred_fallthru
          _
        %s339 = smul.u32 %s30, 128
        %s340 = sld [smem:[#allocation2 + %s339]]
        %s341 = sld [smem:[#allocation7 + %s339]]
        %s342 = sld [smem:[#allocation8 + %s339]]
        %s343 = sadd.s32 %s339, 1
        %s344 = sld [smem:[#allocation2 + %s343]]
        %s345 = sld [smem:[#allocation7 + %s343]]
        %s346 = sld [smem:[#allocation8 + %s343]]
        %s347 = sadd.s32 %s339, 2
        %s348 = sld [smem:[#allocation2 + %s347]]
        %s349 = sld [smem:[#allocation7 + %s347]]
        %s350 = sld [smem:[#allocation8 + %s347]]
        %s351 = sadd.s32 %s339, 3
        %s352 = sld [smem:[#allocation2 + %s351]]
        %s353 = sld [smem:[#allocation7 + %s351]]
        %s354 = sld [smem:[#allocation8 + %s351]]
        %s355 = sadd.s32 %s339, 4
        %s356 = sld [smem:[#allocation2 + %s355]]
        %s357 = sld [smem:[#allocation7 + %s355]]
        %s358 = sld [smem:[#allocation8 + %s355]]
        %s359 = sadd.s32 %s339, 5
        %s360 = sld [smem:[#allocation2 + %s359]]
        %s361 = sld [smem:[#allocation7 + %s359]]
        %s362 = sld [smem:[#allocation8 + %s359]]
        %s363 = sadd.s32 %s339, 6
        %s364 = sld [smem:[#allocation2 + %s363]]
        %s365 = sld [smem:[#allocation7 + %s363]]
        %s366 = sld [smem:[#allocation8 + %s363]]
        %s367 = sadd.s32 %s339, 7
        %s368 = sld [smem:[#allocation2 + %s367]]
        %s369 = sld [smem:[#allocation7 + %s367]]
        %s370 = sld [smem:[#allocation8 + %s367]]
        %s371 = smul.u32 %s31, 16
        %s372 = scvt.s32.f32 %s371
        %s373 = smul.f32 %s372, 0.0038461538
        %v374 = vlaneseq
        %v375 = vshrl.u32 %v374, 7
        %v376 = vadd.s32 %v375, 8
        %v377 = vcvt.s32.f32 %v375
        %v378 = vcvt.s32.f32 %v376
        %v379 = vlaneseq
        %v380 = vand.u32 %v379, 127
        %v381 = vcvt.s32.f32 %v380
        %v382 = vmul.f32 %v377, 0.0038461538
        %v383 = vmul.f32 %v378, 0.0038461538
        %v384 = vstv %s373
        %v385 = vadd.f32 %v382, %v384
        %v386 = vadd.f32 %v383, %v384
        %v387 = vmul.f32 %v381, 0.0038461538
        %v388 = vmul.f32 %v385, %v385
        %v389 = vmul.f32 %v386, %v386
        %v390 = vmul.f32 %v387, %v387
        %v391 = vadd.f32 %v388, %v390
        %v392 = vadd.f32 %v389, %v390
        %v393 = vstv %s340
        %v394 = vmul.f32 %v393, %v385
        %v395 = vmul.f32 %v393, %v386
        %v396 = vstv %s342
        %v397 = vadd.f32 %v394, %v396
        %v398 = vadd.f32 %v395, %v396
        %v399 = vstv %s341
        %v400 = vmul.f32 %v399, %v387
        %v401 = vadd.f32 %v397, %v400
        %v402 = vadd.f32 %v398, %v400
        %v403 = vstv %s344
        %v404 = vmul.f32 %v403, %v385
        %v405 = vmul.f32 %v403, %v386
        %v406 = vstv %s346
        %v407 = vadd.f32 %v404, %v406
        %v408 = vadd.f32 %v405, %v406
        %v409 = vstv %s345
        %v410 = vmul.f32 %v409, %v387
        %v411 = vadd.f32 %v407, %v410
        %v412 = vadd.f32 %v408, %v410
        %v413 = vmin.f32 %v401, %v411
        %v414 = vmin.f32 %v402, %v412
        %v415 = vstv %s348
        %v416 = vmul.f32 %v415, %v385
        %v417 = vmul.f32 %v415, %v386
        %v418 = vstv %s350
        %v419 = vadd.f32 %v416, %v418
        %v420 = vadd.f32 %v417, %v418
        %v421 = vstv %s349
        %v422 = vmul.f32 %v421, %v387
        %v423 = vadd.f32 %v419, %v422
        %v424 = vadd.f32 %v420, %v422
        %v425 = vmin.f32 %v413, %v423
        %v426 = vmin.f32 %v414, %v424
        %v427 = vstv %s352
        %v428 = vmul.f32 %v427, %v385
        %v429 = vmul.f32 %v427, %v386
        %v430 = vstv %s354
        %v431 = vadd.f32 %v428, %v430
        %v432 = vadd.f32 %v429, %v430
        %v433 = vstv %s353
        %v434 = vmul.f32 %v433, %v387
        %v435 = vadd.f32 %v431, %v434
        %v436 = vadd.f32 %v432, %v434
        %v437 = vmin.f32 %v425, %v435
        %v438 = vmin.f32 %v426, %v436
        %v439 = vstv %s356
        %v440 = vmul.f32 %v439, %v385
        %v441 = vmul.f32 %v439, %v386
        %v442 = vstv %s358
        %v443 = vadd.f32 %v440, %v442
        %v444 = vadd.f32 %v441, %v442
        %v445 = vstv %s357
        %v446 = vmul.f32 %v445, %v387
        %v447 = vadd.f32 %v443, %v446
        %v448 = vadd.f32 %v444, %v446
        %v449 = vstv %s360
        %v450 = vmul.f32 %v449, %v385
        %v451 = vmul.f32 %v449, %v386
        %v452 = vstv %s362
        %v453 = vadd.f32 %v450, %v452
        %v454 = vadd.f32 %v451, %v452
        %v455 = vstv %s361
        %v456 = vmul.f32 %v455, %v387
        %v457 = vadd.f32 %v453, %v456
        %v458 = vadd.f32 %v454, %v456
        %v459 = vmin.f32 %v447, %v457
        %v460 = vmin.f32 %v448, %v458
        %v461 = vstv %s364
        %v462 = vmul.f32 %v461, %v385
        %v463 = vmul.f32 %v461, %v386
        %v464 = vstv %s366
        %v465 = vadd.f32 %v462, %v464
        %v466 = vadd.f32 %v463, %v464
        %v467 = vstv %s365
        %v468 = vmul.f32 %v467, %v387
        %v469 = vadd.f32 %v465, %v468
        %v470 = vadd.f32 %v466, %v468
        %v471 = vmin.f32 %v459, %v469
        %v472 = vmin.f32 %v460, %v470
        %v473 = vstv %s368
        %v474 = vmul.f32 %v473, %v385
        %v475 = vmul.f32 %v473, %v386
        %v476 = vstv %s370
        %v477 = vadd.f32 %v474, %v476
        %v478 = vadd.f32 %v475, %v476
        %v479 = vstv %s369
        %v480 = vmul.f32 %v479, %v387
        %v481 = vadd.f32 %v477, %v480
        %v482 = vadd.f32 %v478, %v480
        %v483 = vmin.f32 %v471, %v481
        %v484 = vmin.f32 %v472, %v482
        %v485 = vadd.f32 %v391, %v437
        %v486 = vadd.f32 %v392, %v438
        %v487 = vmax.f32 %v485, 0.0
        %v488 = vmax.f32 %v486, 0.0
        %v489 = vadd.f32 %v391, %v483
        %v490 = vadd.f32 %v392, %v484
        %v491 = vmax.f32 %v489, 0.0
        %v492 = vmax.f32 %v490, 0.0
        %v493 = vrsqrt.pop %v487
        %v494 = vmul.f32 %v487, %v493
        %vm495 = vcmp.eq.f32.partialorder %v487, inf
        %v496 = vsel %vm495, %v487, %v494
        %vm497 = vcmp.eq.f32.partialorder %v487, 0.0
        %v498 = vand.u32 %v487, 2147483648
        %v499 = vsel %vm497, %v498, %v496
        %v500 = vrsqrt.pop %v488
        %v501 = vmul.f32 %v488, %v500
        %vm502 = vcmp.eq.f32.partialorder %v488, inf
        %v503 = vsel %vm502, %v488, %v501
        %vm504 = vcmp.eq.f32.partialorder %v488, 0.0
        %v505 = vand.u32 %v488, 2147483648
        %v506 = vsel %vm504, %v505, %v503
        %v507 = vmul.f32 %v499, 2.0
        %v508 = vmul.f32 %v506, 2.0
        %v509 = vtanh.pop %v507
        %v510 = vtanh.pop %v508
        %v511 = vrsqrt.pop %v491
        %v512 = vmul.f32 %v491, %v511
        %vm513 = vcmp.eq.f32.partialorder %v491, inf
        %v514 = vsel %vm513, %v491, %v512
        %vm515 = vcmp.eq.f32.partialorder %v491, 0.0
        %v516 = vand.u32 %v491, 2147483648
        %v517 = vsel %vm515, %v516, %v514
        %v518 = vrsqrt.pop %v492
        %v519 = vmul.f32 %v492, %v518
        %vm520 = vcmp.eq.f32.partialorder %v492, inf
        %v521 = vsel %vm520, %v492, %v519
        %vm522 = vcmp.eq.f32.partialorder %v492, 0.0
        %v523 = vand.u32 %v492, 2147483648
        %v524 = vsel %vm522, %v523, %v521
        %v525 = vmul.f32 %v517, 2.0
        %v526 = vmul.f32 %v524, 2.0
        %v527 = vtanh.pop %v525
        %v528 = vtanh.pop %v526
        %vm529 = vcmask 130048
        %530 = vst.msk [vmem:[%s299] sm:$0xff] %vm529, %v509
        %531 = vst.msk [vmem:[%s299 + $0x8] sm:$0xff] %vm529, %v510
        %s532 = scalar_lea.vmem %s299, 16 [#allocation11]
        %533 = vst.msk [vmem:[%s532] sm:$0xff] %vm529, %v527
        %534 = vst.msk [vmem:[%s532 + $0x8] sm:$0xff] %vm529, %v528
        %v535 = vld [vmem:[%s274] sm:$0xff]
        %v536 = vld [vmem:[%s274 + $0x8] sm:$0xff]
        %s537 = scalar_lea.vmem %s274, 16 [#allocation10]
        %v538 = vld [vmem:[%s537] sm:$0xff]
        %v539 = vld [vmem:[%s537 + $0x8] sm:$0xff]
        %s540 = scalar_lea.vmem %s274, 32 [#allocation10]
        %v541 = vld [vmem:[%s540] sm:$0xff]
        %v542 = vld [vmem:[%s540 + $0x8] sm:$0xff]
        %v543 = vsel %vm529, %v535, 0.0
        %v544 = vsel %vm529, %v536, 0.0
        %v545 = vadd.f32 %v543, %v544
        %v546 = vld [vmem:[%s313] sm:$0xff]
        %v547 = vadd.f32 %v546, %v545
        %548 = vst.msk [vmem:[%s313] sm:$0xff] %vm529, %v547
        %v549 = vsel %vm529, %v538, 0.0
        %v550 = vsel %vm529, %v539, 0.0
        %v551 = vadd.f32 %v549, %v550
        %s552 = scalar_lea.vmem %s313, 8
        %v553 = vld [vmem:[%s552] sm:$0xff]
        %v554 = vadd.f32 %v553, %v551
        %555 = vst.msk [vmem:[%s552] sm:$0xff] %vm529, %v554
        %v556 = vsel %vm529, %v541, 0.0
        %v557 = vsel %vm529, %v542, 0.0
        %v558 = vadd.f32 %v556, %v557
        %s559 = scalar_lea.vmem %s313, 16
        %v560 = vld [vmem:[%s559] sm:$0xff]
        %v561 = vadd.f32 %v560, %v558
        %562 = vst.msk [vmem:[%s559] sm:$0xff] %vm529, %v561
        %v563 = vsel %vm529, %v509, 0.0
        %v564 = vsel %vm529, %v510, 0.0
        %v565 = vadd.f32 %v563, %v564
        %s566 = scalar_lea.vmem %s313, 24
        %v567 = vld [vmem:[%s566] sm:$0xff]
        %v568 = vadd.f32 %v567, %v565
        %569 = vst.msk [vmem:[%s566] sm:$0xff] %vm529, %v568
        %v570 = vsel %vm529, %v527, 0.0
        %v571 = vsel %vm529, %v528, 0.0
        %v572 = vadd.f32 %v570, %v571
        %s573 = scalar_lea.vmem %s313, 32
        %v574 = vld [vmem:[%s573] sm:$0xff]
        %v575 = vadd.f32 %v574, %v572
        %576 = vst.msk [vmem:[%s573] sm:$0xff] %vm529, %v575
        %v577 = vmul.f32 %v535, %v535
        %v578 = vmul.f32 %v536, %v536
        %v579 = vsel %vm529, %v577, 0.0
        %v580 = vsel %vm529, %v578, 0.0
        %v581 = vadd.f32 %v579, %v580
        %s582 = scalar_lea.vmem %s313, 40
        %v583 = vld [vmem:[%s582] sm:$0xff]
        %v584 = vadd.f32 %v583, %v581
        %585 = vst.msk [vmem:[%s582] sm:$0xff] %vm529, %v584
        %v586 = vmul.f32 %v535, %v538
        %v587 = vmul.f32 %v536, %v539
        %v588 = vsel %vm529, %v586, 0.0
        %v589 = vsel %vm529, %v587, 0.0
        %v590 = vadd.f32 %v588, %v589
        %s591 = scalar_lea.vmem %s313, 48
        %v592 = vld [vmem:[%s591] sm:$0xff]
        %v593 = vadd.f32 %v592, %v590
        %594 = vst.msk [vmem:[%s591] sm:$0xff] %vm529, %v593
        %v595 = vmul.f32 %v535, %v541
        %v596 = vmul.f32 %v536, %v542
        %v597 = vsel %vm529, %v595, 0.0
        %v598 = vsel %vm529, %v596, 0.0
        %v599 = vadd.f32 %v597, %v598
        %s600 = scalar_lea.vmem %s313, 56
        %v601 = vld [vmem:[%s600] sm:$0xff]
        %v602 = vadd.f32 %v601, %v599
        %603 = vst.msk [vmem:[%s600] sm:$0xff] %vm529, %v602
        %v604 = vmul.f32 %v535, %v509
        %v605 = vmul.f32 %v536, %v510
        %v606 = vsel %vm529, %v604, 0.0
        %v607 = vsel %vm529, %v605, 0.0
        %v608 = vadd.f32 %v606, %v607
        %s609 = scalar_lea.vmem %s313, 64
        %v610 = vld [vmem:[%s609] sm:$0xff]
        %v611 = vadd.f32 %v610, %v608
        %612 = vst.msk [vmem:[%s609] sm:$0xff] %vm529, %v611
        %v613 = vmul.f32 %v535, %v527
        %v614 = vmul.f32 %v536, %v528
        %v615 = vsel %vm529, %v613, 0.0
        %v616 = vsel %vm529, %v614, 0.0
        %v617 = vadd.f32 %v615, %v616
        %s618 = scalar_lea.vmem %s313, 72
        %v619 = vld [vmem:[%s618] sm:$0xff]
        %v620 = vadd.f32 %v619, %v617
        %621 = vst.msk [vmem:[%s618] sm:$0xff] %vm529, %v620
        %v622 = vmul.f32 %v538, %v538
        %v623 = vmul.f32 %v539, %v539
        %v624 = vsel %vm529, %v622, 0.0
        %v625 = vsel %vm529, %v623, 0.0
        %v626 = vadd.f32 %v624, %v625
        %s627 = scalar_lea.vmem %s313, 80
        %v628 = vld [vmem:[%s627] sm:$0xff]
        %v629 = vadd.f32 %v628, %v626
        %630 = vst.msk [vmem:[%s627] sm:$0xff] %vm529, %v629
        %v631 = vmul.f32 %v538, %v541
        %v632 = vmul.f32 %v539, %v542
        %v633 = vsel %vm529, %v631, 0.0
        %v634 = vsel %vm529, %v632, 0.0
        %v635 = vadd.f32 %v633, %v634
        %s636 = scalar_lea.vmem %s313, 88
        %v637 = vld [vmem:[%s636] sm:$0xff]
        %v638 = vadd.f32 %v637, %v635
        %639 = vst.msk [vmem:[%s636] sm:$0xff] %vm529, %v638
        %v640 = vmul.f32 %v538, %v509
        %v641 = vmul.f32 %v539, %v510
        %v642 = vsel %vm529, %v640, 0.0
        %v643 = vsel %vm529, %v641, 0.0
        %v644 = vadd.f32 %v642, %v643
        %s645 = scalar_lea.vmem %s313, 96
        %v646 = vld [vmem:[%s645] sm:$0xff]
        %v647 = vadd.f32 %v646, %v644
        %648 = vst.msk [vmem:[%s645] sm:$0xff] %vm529, %v647
        %v649 = vmul.f32 %v538, %v527
        %v650 = vmul.f32 %v539, %v528
        %v651 = vsel %vm529, %v649, 0.0
        %v652 = vsel %vm529, %v650, 0.0
        %v653 = vadd.f32 %v651, %v652
        %s654 = scalar_lea.vmem %s313, 104
        %v655 = vld [vmem:[%s654] sm:$0xff]
        %v656 = vadd.f32 %v655, %v653
        %657 = vst.msk [vmem:[%s654] sm:$0xff] %vm529, %v656
        %v658 = vmul.f32 %v541, %v541
        %v659 = vmul.f32 %v542, %v542
        %v660 = vsel %vm529, %v658, 0.0
        %v661 = vsel %vm529, %v659, 0.0
        %v662 = vadd.f32 %v660, %v661
        %s663 = scalar_lea.vmem %s313, 112
        %v664 = vld [vmem:[%s663] sm:$0xff]
        %v665 = vadd.f32 %v664, %v662
        %666 = vst.msk [vmem:[%s663] sm:$0xff] %vm529, %v665
        %v667 = vmul.f32 %v541, %v509
        %v668 = vmul.f32 %v542, %v510
        %v669 = vsel %vm529, %v667, 0.0
        %v670 = vsel %vm529, %v668, 0.0
        %v671 = vadd.f32 %v669, %v670
        %s672 = scalar_lea.vmem %s313, 120
        %v673 = vld [vmem:[%s672] sm:$0xff]
        %v674 = vadd.f32 %v673, %v671
        %675 = vst.msk [vmem:[%s672] sm:$0xff] %vm529, %v674
        %v676 = vmul.f32 %v541, %v527
        %v677 = vmul.f32 %v542, %v528
        %v678 = vsel %vm529, %v676, 0.0
        %v679 = vsel %vm529, %v677, 0.0
        %v680 = vadd.f32 %v678, %v679
        %s681 = scalar_lea.vmem %s313, 128
        %v682 = vld [vmem:[%s681] sm:$0xff]
        %v683 = vadd.f32 %v682, %v680
        %684 = vst.msk [vmem:[%s681] sm:$0xff] %vm529, %v683
        %v685 = vmul.f32 %v509, %v509
        %v686 = vmul.f32 %v510, %v510
        %v687 = vsel %vm529, %v685, 0.0
        %v688 = vsel %vm529, %v686, 0.0
        %v689 = vadd.f32 %v687, %v688
        %s690 = scalar_lea.vmem %s313, 136
        %v691 = vld [vmem:[%s690] sm:$0xff]
        %v692 = vadd.f32 %v691, %v689
        %693 = vst.msk [vmem:[%s690] sm:$0xff] %vm529, %v692
        %v694 = vmul.f32 %v509, %v527
        %v695 = vmul.f32 %v510, %v528
        %v696 = vsel %vm529, %v694, 0.0
        %v697 = vsel %vm529, %v695, 0.0
        %v698 = vadd.f32 %v696, %v697
        %s699 = scalar_lea.vmem %s313, 144
        %v700 = vld [vmem:[%s699] sm:$0xff]
        %v701 = vadd.f32 %v700, %v698
        %702 = vst.msk [vmem:[%s699] sm:$0xff] %vm529, %v701
        %v703 = vmul.f32 %v527, %v527
        %v704 = vmul.f32 %v528, %v528
        %v705 = vsel %vm529, %v703, 0.0
        %v706 = vsel %vm529, %v704, 0.0
        %v707 = vadd.f32 %v705, %v706
        %s708 = scalar_lea.vmem %s313, 152
        %v709 = vld [vmem:[%s708] sm:$0xff]
        %v710 = vadd.f32 %v709, %v707
        %711 = vst.msk [vmem:[%s708] sm:$0xff] %vm529, %v710
        %s712 = sand.u32 %s139, 1
        %s713 = scalar_lea.sflag [#allocation4], %s712
        %s714 = sand.u32 %s139, 1
        %s715 = smul.addr %s714, 32
        %s716 = scalar_lea.vmem [#allocation11], %s715
        %p717 = scmp.lt.s32.totalorder %s30, 1
        %s718 = scalar_select %p717, %s30, 1
        %s719 = smul.addr %s718, 20
        %s720 = smul.addr %s719, 8
        %s721 = scalar_lea.vmem %s5, %s720
        // Predicated region
        $region57: #{tpu_custom_call.1} parent=35 // pred_check
          %p722 = pneg %p149
        $region58: #{tpu_custom_call.1} parent=35 // pred_check_branch
          %724 = sbr.rel (%p722) target = $region60
        $region59: #{tpu_custom_call.1} parent=35 // pred_region
          %s725 = smul.u32 2, %s31
          %s727 = ssub.s32 512, 512
          %728 = vsyncadd %s713, %s727
          %s729 = smul.addr %s30, 4
          %s730 = sadd.s32 %s725, %s729
          %s731 = smul.addr %s730, 128
          %s732 = scalar_lea.hbm %s4, %s731
          %s733 = sshll.u32 %s716, 4
          %s734 = int_to_ptr.vmem [resolvable:$true] %s733
          %739 = dma.vmem_to_hbm [thread:$0]  %s734, 512, %s732, %s713, 128, 128, 8
        $region60: #{tpu_custom_call.1} parent=35 // pred_fallthru
          _
        // Predicated region
        $region61: #{tpu_custom_call.1} parent=35 // pred_check
          %p740 = pneg %p175
        $region62: #{tpu_custom_call.1} parent=35 // pred_check_branch
          %742 = sbr.rel (%p740) target = $region64
        $region63: #{tpu_custom_call.1} parent=35 // pred_region
          _
        $region64: #{tpu_custom_call.1} parent=35 // pred_fallthru
          _
      $region36: #{tpu_custom_call.1} parent=5 // pred_fallthru
        _
      %p743 = scmp.le.s32.totalorder 2, %s21
      // Predicated region
      $region65: #{tpu_custom_call.1} parent=5 // pred_check
        %p744 = pneg %p743
      $region66: #{tpu_custom_call.1} parent=5 // pred_check_branch
        %746 = sbr.rel (%p744) target = $region68
      $region67: #{tpu_custom_call.1} parent=5 // pred_region
        %s747 = ssub.s32 %s21, 2
        // Predicated region
        $region69: #{tpu_custom_call.1} parent=67 // pred_check
          %p748 = pneg %p155
        $region70: #{tpu_custom_call.1} parent=67 // pred_check_branch
          %750 = sbr.rel (%p748) target = $region72
        $region71: #{tpu_custom_call.1} parent=67 // pred_region
          %s751 = sand.u32 %s140, 1
          %s752 = scalar_lea.sflag [#allocation4], %s751
          %s753 = sand.u32 %s140, 1
          %s754 = smul.addr %s753, 32
          %s755 = scalar_lea.vmem [#allocation11], %s754
          %756 = dma.done %s752, 512
        $region72: #{tpu_custom_call.1} parent=67 // pred_fallthru
          _
        // Predicated region
        $region73: #{tpu_custom_call.1} parent=67 // pred_check
          %p757 = pneg %p181
        $region74: #{tpu_custom_call.1} parent=67 // pred_check_branch
          %759 = sbr.rel (%p757) target = $region76
        $region75: #{tpu_custom_call.1} parent=67 // pred_region
          %p760 = scmp.lt.s32.totalorder %s32, 1
          %s761 = scalar_select %p760, %s32, 1
          %s762 = smul.addr %s761, 20
          %s763 = smul.addr %s762, 8
          %s764 = scalar_lea.vmem %s5, %s763
        $region76: #{tpu_custom_call.1} parent=67 // pred_fallthru
          _
      $region68: #{tpu_custom_call.1} parent=5 // pred_fallthru
        _
    $region6: #{tpu_custom_call.1} parent=1 // loop_footer
      %s25 = sadd.s32 1, %s21
    $region7: #{tpu_custom_call.1} parent=1 // loop_footer_branch
      %20 = sbr.rel target = $region3
    $region8: #{tpu_custom_call.1} parent=1 // loop_exit
      _
    %765 = vsyncpa [#allocation3], 1
    %s766 = scalar_lea.sflag [#allocation3], 1
    %767 = vsyncpa %s766, 1
    %768 = vsyncpa [#allocation4], 1
    %s769 = scalar_lea.sflag [#allocation4], 1
    %770 = vsyncpa %s769, 1
    %771 = vsyncpa [#allocation5], 1
    %s772 = scalar_lea.sflag [#allocation5], 1
    %773 = vsyncpa %s772, 1
    %774 = vsyncpa [#allocation6], 1
    %s775 = scalar_lea.sflag [#allocation6], 1
    %776 = vsyncpa %s775, 1
    %777 = vsyncpa [#allocation9], 1

</llo_original>
